<compile_context>
chip_gen: v7x
topology: tpu7x:2x2x1
jax: 0.10.0
libtpu: 0.0.40
codegen_flags: <defaults>
</compile_context>

<pallas_src>
import jax
import jax.numpy as jnp
from jax import lax
from jax.experimental import pallas as pl
from jax.experimental.pallas import tpu as pltpu


# ----------------------------- helpers --------------------------------------


def _round_up(x, m):
    return ((x + m - 1) // m) * m


def _pick_time_chunk(T, max_chunk=8):
    """Largest divisor of T that is <= max_chunk (inner loop is fully unrolled)."""
    for c in range(min(T, max_chunk), 0, -1):
        if T % c == 0:
            return c
    return 1


def _pad_gates_last(w, h, hp):
    """Pad the last (3*h) axis per-gate to (3*hp) with zeros: [r|z|n] layout kept."""
    if hp == h:
        return w
    lead = w.shape[:-1]
    w3 = w.reshape(lead + (3, h))
    pad = [(0, 0)] * (len(lead) + 1) + [(0, hp - h)]
    return jnp.pad(w3, pad).reshape(lead + (3 * hp,))


# ----------------------------- Pallas kernel --------------------------------


def gru_recurrent_kernel(gi_ref, w_hh_ref, b_hhn_ref, h_out_ref, h_ref):
    """One chunk of Tc timesteps per grid iteration; h_ref carries the recurrence.

    gi_ref:    (Tc, Bp, 3*Hp)  precomputed x@W_ih + folded biases (r,z biases inside)
    w_hh_ref:  (Hp, 3*Hp)      hidden-to-hidden weights (resident)
    b_hhn_ref: (1, Hp)         hidden bias of the n gate (must stay inside r*(...))
    h_out_ref: (Tc, Bp, Hp)    hidden states for this chunk
    h_ref:     (Bp, Hp)        VMEM scratch carrying h across chunks
    """
    c = pl.program_id(0)

    @pl.when(c == 0)
    def _():
        # PyTorch default initial hidden state is zeros.
        h_ref[...] = jnp.zeros_like(h_ref)

    Bp, Hp = h_ref.shape
    Tc = gi_ref.shape[0]

    # Hoist the (1,Hp)->(Bp,Hp) broadcast out of the unrolled step loop
    # (JAX does not CSE broadcast_in_dim).
    b_hhn = jnp.broadcast_to(b_hhn_ref[...], (Bp, Hp))

    def step(t, h):
        gi = gi_ref[t]                                            # (Bp, 3Hp), contiguous slab
        # Keep the W_hh load inside the loop (192+ KiB would spill the 64-vreg file).
        gh = jnp.dot(h, w_hh_ref[...], preferred_element_type=jnp.float32)
        # Gate slices are lane-aligned because Hp is a multiple of 128.
        # r and z share one sigmoid over a single (Bp, 2*Hp) slab.
        rz = jax.nn.sigmoid(gi[:, :2 * Hp] + gh[:, :2 * Hp])
        r = rz[:, :Hp]
        z = rz[:, Hp:]
        n = jnp.tanh(gi[:, 2 * Hp:] + r * (gh[:, 2 * Hp:] + b_hhn))
        h_new = (1.0 - z) * n + z * h
        h_out_ref[t] = h_new.astype(h_out_ref.dtype)              # full-lane store
        return h_new

    # Fully unrolled: h stays in vregs across the chunk; scratch touched once.
    h_ref[...] = lax.fori_loop(0, Tc, step, h_ref[...], unroll=True)


# ----------------------------- wrapper ---------------------------------------


def gru_forward(x, params):
    """x: (B, T, I) float32. Returns proj(gru(x)) with PyTorch squeeze(1) semantics."""
    B, T, I = x.shape
    w_ih_t = params["w_ih_t"]    # (I, 3H)
    w_hh_t = params["w_hh_t"]    # (H, 3H)
    b_ih = params["b_ih"]        # (1, 3H)
    b_hh = params["b_hh"]        # (1, 3H)
    w_p_t = params["w_p_t"]      # (H, O)
    b_p = params["b_p"]          # (1, O)
    H = w_hh_t.shape[0]
    O = w_p_t.shape[1]

    Bp = _round_up(B, 8)     # f32 sublane multiple
    Hp = _round_up(H, 128)   # lane multiple -> lane-aligned gate slices, unmasked vst
    Tc = _pick_time_chunk(T, 8)

    # --- zero-pad parameters (padded hidden units stay exactly 0 through time) ---
    w_ih_p = _pad_gates_last(w_ih_t, H, Hp)                                  # (I, 3Hp)
    w_hh_p = _pad_gates_last(jnp.pad(w_hh_t, ((0, Hp - H), (0, 0))), H, Hp)  # (Hp, 3Hp)
    w_p_p = jnp.pad(w_p_t, ((0, Hp - H), (0, 0)))                            # (Hp, O)
    # Fold b_ih (all gates) + b_hh (r,z only) into GI; b_hh_n must stay inside
    # the recurrence because n = tanh(i_n + r * (h @ W_hh_n + b_hh_n)).
    b_hh_rz = jnp.concatenate([b_hh[:, :2 * H], jnp.zeros((1, H), b_hh.dtype)], axis=-1)
    b_fold = _pad_gates_last(b_ih + b_hh_rz, H, Hp)                          # (1, 3Hp)
    b_hhn = jnp.pad(b_hh[:, 2 * H:], ((0, 0), (0, Hp - H)))                  # (1, Hp)

    # --- hoisted input-gate matmul: one big MXU matmul with M = T*Bp -------------
    x_tm = jnp.transpose(x, (1, 0, 2))                                       # (T, B, I)
    if Bp != B:
        x_tm = jnp.pad(x_tm, ((0, 0), (0, Bp - B), (0, 0)))
    gi = (jnp.dot(x_tm.reshape(T * Bp, I), w_ih_p,
                  preferred_element_type=jnp.float32)
          + b_fold).reshape(T, Bp, 3 * Hp)

    # --- VMEM budget (double-buffered gi/out/weights + h scratch) + headroom -----
    vmem_bytes = 4 * (2 * Tc * Bp * 3 * Hp      # gi blocks
                      + 2 * Tc * Bp * Hp        # out blocks
                      + 2 * Hp * 3 * Hp         # W_hh
                      + 2 * 8 * Hp              # b_hh_n (padded tile)
                      + Bp * Hp)                # h scratch
    vmem_limit = min(max(4 * vmem_bytes, 8 << 20), 32 << 20)

    cost = pl.CostEstimate(
        flops=int(2 * T * Bp * Hp * 3 * Hp),
        transcendentals=int(3 * T * Bp * Hp),
        bytes_accessed=int(4 * (T * Bp * 3 * Hp + T * Bp * Hp + Hp * 3 * Hp + Hp)),
    )

    # NOTE: resident operands (W_hh, b_hh_n) are tiny here, so default double
    # buffering is left in place rather than pl.Buffered(1).
    recurrence = pl.pallas_call(
        gru_recurrent_kernel,
        out_shape=jax.ShapeDtypeStruct((T, Bp, Hp), jnp.float32),
        grid_spec=pltpu.PrefetchScalarGridSpec(
            num_scalar_prefetch=0,
            grid=(T // Tc,),
            in_specs=[
                pl.BlockSpec((Tc, Bp, 3 * Hp), lambda c: (c, 0, 0)),  # GI chunk
                pl.BlockSpec((Hp, 3 * Hp), lambda c: (0, 0)),         # W_hh (resident)
                pl.BlockSpec((1, Hp), lambda c: (0, 0)),              # b_hh_n
            ],
            out_specs=pl.BlockSpec((Tc, Bp, Hp), lambda c: (c, 0, 0)),
            scratch_shapes=[pltpu.VMEM((Bp, Hp), jnp.float32)],       # hidden carry
        ),
        compiler_params=pltpu.CompilerParams(
            dimension_semantics=("arbitrary",),    # recurrence: strictly sequential
            vmem_limit_bytes=int(vmem_limit),
        ),
        cost_estimate=cost,
    )

    h_all = recurrence(gi, w_hh_p, b_hhn)                     # (T, Bp, Hp)

    # --- hoisted output projection (dropout p=0.0 is identity) -------------------
    # Project in time-major order (no transpose of the large Hp-wide tensor), then
    # transpose only the small (T, B, O) result back to batch-major.
    y_tm = (jnp.dot(h_all.reshape(T * Bp, Hp), w_p_p,
                    preferred_element_type=jnp.float32) + b_p).reshape(T, Bp, O)
    y = jnp.transpose(y_tm[:, :B, :], (1, 0, 2))              # (B, T, O)

    # PyTorch .squeeze(1): only drops the seq axis if it is size 1.
    if y.shape[1] == 1:
        y = y[:, 0, :]
    return y


# ----------------------------- reference -------------------------------------


def gru_reference(x, params):
    """Pure-JAX reference (lax.scan) mirroring torch.nn.GRU semantics."""
    B, T, I = x.shape
    H = params["w_hh_t"].shape[0]

    def step(h, x_t):
        gi = x_t @ params["w_ih_t"] + params["b_ih"]
        gh = h @ params["w_hh_t"] + params["b_hh"]
        i_r, i_z, i_n = jnp.split(gi, 3, axis=-1)
        h_r, h_z, h_n = jnp.split(gh, 3, axis=-1)
        r = jax.nn.sigmoid(i_r + h_r)
        z = jax.nn.sigmoid(i_z + h_z)
        n = jnp.tanh(i_n + r * h_n)
        h_new = (1.0 - z) * n + z * h
        return h_new, h_new

    h0 = jnp.zeros((B, H), jnp.float32)
    _, hs = lax.scan(step, h0, jnp.transpose(x, (1, 0, 2)))
    out = jnp.transpose(hs, (1, 0, 2))                        # (B, T, H)
    y = out @ params["w_p_t"] + params["b_p"]
    if y.shape[1] == 1:
        y = y[:, 0, :]
    return y


def init_params(key, input_size, hidden_size, output_size):
    ks = jax.random.split(key, 6)
    k_gru = 1.0 / jnp.sqrt(hidden_size)
    k_lin = 1.0 / jnp.sqrt(hidden_size)
    # Stored pre-transposed so kernels do x @ W directly (no in-kernel .T).
    w_ih_t = jax.random.uniform(ks[0], (input_size, 3 * hidden_size),
                                jnp.float32, -k_gru, k_gru)
    w_hh_t = jax.random.uniform(ks[1], (hidden_size, 3 * hidden_size),
                                jnp.float32, -k_gru, k_gru)
    b_ih = jax.random.uniform(ks[2], (1, 3 * hidden_size), jnp.float32, -k_gru, k_gru)
    b_hh = jax.random.uniform(ks[3], (1, 3 * hidden_size), jnp.float32, -k_gru, k_gru)
    w_p_t = jax.random.uniform(ks[4], (hidden_size, output_size),
                               jnp.float32, -k_lin, k_lin)
    b_p = jax.random.uniform(ks[5], (1, output_size), jnp.float32, -k_lin, k_lin)
    return dict(w_ih_t=w_ih_t, w_hh_t=w_hh_t, b_ih=b_ih, b_hh=b_hh,
                w_p_t=w_p_t, b_p=b_p)


if __name__ == "__main__":
    B, T, I, H, O = 2, 8, 4, 32, 16
    key = jax.random.PRNGKey(0)
    kx, kp = jax.random.split(key)
    x = jax.random.normal(kx, (B, T, I), jnp.float32)
    params = init_params(kp, I, H, O)

    y = gru_forward(x, params)
    jax.block_until_ready(y)

    y_ref = gru_reference(x, params)
    assert y.shape == y_ref.shape, (y.shape, y_ref.shape)
    assert jnp.allclose(y, y_ref, atol=1e-4, rtol=1e-4), float(jnp.max(jnp.abs(y - y_ref)))

    print("KERNEL_OK")
</pallas_src>

<mosaic_0001>
module attributes {stable_mosaic.version = 11 : i64} {
  func.func @gru_recurrent_kernel(%arg0: i32, %arg1: memref<8x8x384xf32, #tpu.memory_space<vmem>>, %arg2: memref<128x384xf32, #tpu.memory_space<vmem>>, %arg3: memref<1x128xf32, #tpu.memory_space<vmem>>, %arg4: memref<8x8x128xf32, #tpu.memory_space<vmem>>, %arg5: memref<8x128xf32, #tpu.memory_space<vmem>>) attributes {dimension_semantics = [#tpu.dimension_semantics<arbitrary>], iteration_bounds = array<i64: 1>, scalar_prefetch = 0 : i64, scratch_operands = 1 : i64, tpu.core_type = #tpu.core_type<tc>, window_params = [{transform_indices = @transform_0, window_bounds = array<i64: 8, 8, 384>}, {pipeline_mode = #tpu.pipeline_mode<synchronous>, transform_indices = @transform_1, window_bounds = array<i64: 128, 384>}, {pipeline_mode = #tpu.pipeline_mode<synchronous>, transform_indices = @transform_2, window_bounds = array<i64: 1, 128>}, {transform_indices = @transform_3, window_bounds = array<i64: 8, 8, 128>}]} {
    %c0_i32 = arith.constant 0 : i32
    %0 = arith.cmpi eq, %arg0, %c0_i32 : i32
    %1 = arith.extui %0 : i1 to i32
    %c0_i32_0 = arith.constant 0 : i32
    %2 = arith.cmpi ne, %1, %c0_i32_0 : i32
    scf.if %2 {
      %cst_78 = arith.constant 0.000000e+00 : f32
      %248 = vector.broadcast %cst_78 : f32 to vector<8x128xf32>
      %c0_79 = arith.constant 0 : index
      %c0_80 = arith.constant 0 : index
      %249 = vector.load %arg5[%c0_79, %c0_80] : memref<8x128xf32, #tpu.memory_space<vmem>>, vector<8x128xf32>
      tpu.vector_store %arg5[%c0_79, %c0_80], %248 {strides = array<i32>} : memref<8x128xf32, #tpu.memory_space<vmem>>, vector<8x128xf32>,
    } else {
    }
    %c0 = arith.constant 0 : index
    %c0_1 = arith.constant 0 : index
    %3 = vector.load %arg3[%c0, %c0_1] : memref<1x128xf32, #tpu.memory_space<vmem>>, vector<1x128xf32>
    %4 = vector.shape_cast %3 : vector<1x128xf32> to vector<1x128xf32>
    %5 = vector.broadcast %4 : vector<1x128xf32> to vector<8x128xf32>
    %c0_2 = arith.constant 0 : index
    %c0_3 = arith.constant 0 : index
    %6 = vector.load %arg5[%c0_2, %c0_3] : memref<8x128xf32, #tpu.memory_space<vmem>>, vector<8x128xf32>
    %c0_i32_4 = arith.constant 0 : i32
    %7 = arith.index_cast %c0_i32_4 : i32 to index
    %c0_5 = arith.constant 0 : index
    %c0_6 = arith.constant 0 : index
    %8 = vector.load %arg1[%7, %c0_5, %c0_6] : memref<8x8x384xf32, #tpu.memory_space<vmem>>, vector<1x8x384xf32>
    %9 = vector.shape_cast %8 : vector<1x8x384xf32> to vector<8x384xf32>
    %c0_7 = arith.constant 0 : index
    %c0_8 = arith.constant 0 : index
    %10 = vector.load %arg2[%c0_7, %c0_8] : memref<128x384xf32, #tpu.memory_space<vmem>>, vector<128x384xf32>
    %cst = arith.constant dense<0.000000e+00> : vector<8x384xf32>
    %11 = tpu.matmul %6, %10, %cst {dimension_numbers = #tpu.dot_dimension_numbers<[1], [0], [0], [1], [0, 0, 1, 1], [], []>} : vector<8x128xf32>, vector<128x384xf32>, vector<8x384xf32> -> vector<8x384xf32>
    %12 = vector.extract_strided_slice %9 {offsets = [0, 0], sizes = [8, 256], strides = [1, 1]} : vector<8x384xf32> to vector<8x256xf32>
    %13 = vector.extract_strided_slice %11 {offsets = [0, 0], sizes = [8, 256], strides = [1, 1]} : vector<8x384xf32> to vector<8x256xf32>
    %14 = arith.addf %12, %13 : vector<8x256xf32>
    %15 = arith.negf %14 : vector<8x256xf32>
    %16 = math.exp %15 : vector<8x256xf32>
    %cst_9 = arith.constant 1.000000e+00 : f32
    %17 = vector.broadcast %cst_9 : f32 to vector<8x256xf32>
    %18 = arith.addf %17, %16 : vector<8x256xf32>
    %19 = arith.divf %17, %18 : vector<8x256xf32>
    %20 = vector.extract_strided_slice %19 {offsets = [0, 0], sizes = [8, 128], strides = [1, 1]} : vector<8x256xf32> to vector<8x128xf32>
    %21 = vector.extract_strided_slice %19 {offsets = [0, 128], sizes = [8, 128], strides = [1, 1]} : vector<8x256xf32> to vector<8x128xf32>
    %22 = vector.extract_strided_slice %9 {offsets = [0, 256], sizes = [8, 128], strides = [1, 1]} : vector<8x384xf32> to vector<8x128xf32>
    %23 = vector.extract_strided_slice %11 {offsets = [0, 256], sizes = [8, 128], strides = [1, 1]} : vector<8x384xf32> to vector<8x128xf32>
    %24 = arith.addf %23, %5 : vector<8x128xf32>
    %25 = arith.mulf %20, %24 : vector<8x128xf32>
    %26 = arith.addf %22, %25 : vector<8x128xf32>
    %27 = math.tanh %26 : vector<8x128xf32>
    %cst_10 = arith.constant 1.000000e+00 : f32
    %28 = vector.broadcast %cst_10 : f32 to vector<8x128xf32>
    %29 = arith.subf %28, %21 : vector<8x128xf32>
    %30 = arith.mulf %29, %27 : vector<8x128xf32>
    %31 = arith.mulf %21, %6 : vector<8x128xf32>
    %32 = arith.addf %30, %31 : vector<8x128xf32>
    %33 = arith.index_cast %c0_i32_4 : i32 to index
    %c0_11 = arith.constant 0 : index
    %c0_12 = arith.constant 0 : index
    %34 = vector.load %arg4[%33, %c0_11, %c0_12] : memref<8x8x128xf32, #tpu.memory_space<vmem>>, vector<1x8x128xf32>
    %35 = vector.shape_cast %34 : vector<1x8x128xf32> to vector<8x128xf32>
    %36 = vector.shape_cast %32 : vector<8x128xf32> to vector<1x8x128xf32>
    tpu.vector_store %arg4[%33, %c0_11, %c0_12], %36 {strides = array<i32>} : memref<8x8x128xf32, #tpu.memory_space<vmem>>, vector<1x8x128xf32>,
    %c1_i32 = arith.constant 1 : i32
    %37 = arith.index_cast %c1_i32 : i32 to index
    %c0_13 = arith.constant 0 : index
    %c0_14 = arith.constant 0 : index
    %38 = vector.load %arg1[%37, %c0_13, %c0_14] : memref<8x8x384xf32, #tpu.memory_space<vmem>>, vector<1x8x384xf32>
    %39 = vector.shape_cast %38 : vector<1x8x384xf32> to vector<8x384xf32>
    %c0_15 = arith.constant 0 : index
    %c0_16 = arith.constant 0 : index
    %40 = vector.load %arg2[%c0_15, %c0_16] : memref<128x384xf32, #tpu.memory_space<vmem>>, vector<128x384xf32>
    %cst_17 = arith.constant dense<0.000000e+00> : vector<8x384xf32>
    %41 = tpu.matmul %32, %40, %cst_17 {dimension_numbers = #tpu.dot_dimension_numbers<[1], [0], [0], [1], [0, 0, 1, 1], [], []>} : vector<8x128xf32>, vector<128x384xf32>, vector<8x384xf32> -> vector<8x384xf32>
    %42 = vector.extract_strided_slice %39 {offsets = [0, 0], sizes = [8, 256], strides = [1, 1]} : vector<8x384xf32> to vector<8x256xf32>
    %43 = vector.extract_strided_slice %41 {offsets = [0, 0], sizes = [8, 256], strides = [1, 1]} : vector<8x384xf32> to vector<8x256xf32>
    %44 = arith.addf %42, %43 : vector<8x256xf32>
    %45 = arith.negf %44 : vector<8x256xf32>
    %46 = math.exp %45 : vector<8x256xf32>
    %cst_18 = arith.constant 1.000000e+00 : f32
    %47 = vector.broadcast %cst_18 : f32 to vector<8x256xf32>
    %48 = arith.addf %47, %46 : vector<8x256xf32>
    %49 = arith.divf %47, %48 : vector<8x256xf32>
    %50 = vector.extract_strided_slice %49 {offsets = [0, 0], sizes = [8, 128], strides = [1, 1]} : vector<8x256xf32> to vector<8x128xf32>
    %51 = vector.extract_strided_slice %49 {offsets = [0, 128], sizes = [8, 128], strides = [1, 1]} : vector<8x256xf32> to vector<8x128xf32>
    %52 = vector.extract_strided_slice %39 {offsets = [0, 256], sizes = [8, 128], strides = [1, 1]} : vector<8x384xf32> to vector<8x128xf32>
    %53 = vector.extract_strided_slice %41 {offsets = [0, 256], sizes = [8, 128], strides = [1, 1]} : vector<8x384xf32> to vector<8x128xf32>
    %54 = arith.addf %53, %5 : vector<8x128xf32>
    %55 = arith.mulf %50, %54 : vector<8x128xf32>
    %56 = arith.addf %52, %55 : vector<8x128xf32>
    %57 = math.tanh %56 : vector<8x128xf32>
    %cst_19 = arith.constant 1.000000e+00 : f32
    %58 = vector.broadcast %cst_19 : f32 to vector<8x128xf32>
    %59 = arith.subf %58, %51 : vector<8x128xf32>
    %60 = arith.mulf %59, %57 : vector<8x128xf32>
    %61 = arith.mulf %51, %32 : vector<8x128xf32>
    %62 = arith.addf %60, %61 : vector<8x128xf32>
    %63 = arith.index_cast %c1_i32 : i32 to index
    %c0_20 = arith.constant 0 : index
    %c0_21 = arith.constant 0 : index
    %64 = vector.load %arg4[%63, %c0_20, %c0_21] : memref<8x8x128xf32, #tpu.memory_space<vmem>>, vector<1x8x128xf32>
    %65 = vector.shape_cast %64 : vector<1x8x128xf32> to vector<8x128xf32>
    %66 = vector.shape_cast %62 : vector<8x128xf32> to vector<1x8x128xf32>
    tpu.vector_store %arg4[%63, %c0_20, %c0_21], %66 {strides = array<i32>} : memref<8x8x128xf32, #tpu.memory_space<vmem>>, vector<1x8x128xf32>,
    %c2_i32 = arith.constant 2 : i32
    %67 = arith.index_cast %c2_i32 : i32 to index
    %c0_22 = arith.constant 0 : index
    %c0_23 = arith.constant 0 : index
    %68 = vector.load %arg1[%67, %c0_22, %c0_23] : memref<8x8x384xf32, #tpu.memory_space<vmem>>, vector<1x8x384xf32>
    %69 = vector.shape_cast %68 : vector<1x8x384xf32> to vector<8x384xf32>
    %c0_24 = arith.constant 0 : index
    %c0_25 = arith.constant 0 : index
    %70 = vector.load %arg2[%c0_24, %c0_25] : memref<128x384xf32, #tpu.memory_space<vmem>>, vector<128x384xf32>
    %cst_26 = arith.constant dense<0.000000e+00> : vector<8x384xf32>
    %71 = tpu.matmul %62, %70, %cst_26 {dimension_numbers = #tpu.dot_dimension_numbers<[1], [0], [0], [1], [0, 0, 1, 1], [], []>} : vector<8x128xf32>, vector<128x384xf32>, vector<8x384xf32> -> vector<8x384xf32>
    %72 = vector.extract_strided_slice %69 {offsets = [0, 0], sizes = [8, 256], strides = [1, 1]} : vector<8x384xf32> to vector<8x256xf32>
    %73 = vector.extract_strided_slice %71 {offsets = [0, 0], sizes = [8, 256], strides = [1, 1]} : vector<8x384xf32> to vector<8x256xf32>
    %74 = arith.addf %72, %73 : vector<8x256xf32>
    %75 = arith.negf %74 : vector<8x256xf32>
    %76 = math.exp %75 : vector<8x256xf32>
    %cst_27 = arith.constant 1.000000e+00 : f32
    %77 = vector.broadcast %cst_27 : f32 to vector<8x256xf32>
    %78 = arith.addf %77, %76 : vector<8x256xf32>
    %79 = arith.divf %77, %78 : vector<8x256xf32>
    %80 = vector.extract_strided_slice %79 {offsets = [0, 0], sizes = [8, 128], strides = [1, 1]} : vector<8x256xf32> to vector<8x128xf32>
    %81 = vector.extract_strided_slice %79 {offsets = [0, 128], sizes = [8, 128], strides = [1, 1]} : vector<8x256xf32> to vector<8x128xf32>
    %82 = vector.extract_strided_slice %69 {offsets = [0, 256], sizes = [8, 128], strides = [1, 1]} : vector<8x384xf32> to vector<8x128xf32>
    %83 = vector.extract_strided_slice %71 {offsets = [0, 256], sizes = [8, 128], strides = [1, 1]} : vector<8x384xf32> to vector<8x128xf32>
    %84 = arith.addf %83, %5 : vector<8x128xf32>
    %85 = arith.mulf %80, %84 : vector<8x128xf32>
    %86 = arith.addf %82, %85 : vector<8x128xf32>
    %87 = math.tanh %86 : vector<8x128xf32>
    %cst_28 = arith.constant 1.000000e+00 : f32
    %88 = vector.broadcast %cst_28 : f32 to vector<8x128xf32>
    %89 = arith.subf %88, %81 : vector<8x128xf32>
    %90 = arith.mulf %89, %87 : vector<8x128xf32>
    %91 = arith.mulf %81, %62 : vector<8x128xf32>
    %92 = arith.addf %90, %91 : vector<8x128xf32>
    %93 = arith.index_cast %c2_i32 : i32 to index
    %c0_29 = arith.constant 0 : index
    %c0_30 = arith.constant 0 : index
    %94 = vector.load %arg4[%93, %c0_29, %c0_30] : memref<8x8x128xf32, #tpu.memory_space<vmem>>, vector<1x8x128xf32>
    %95 = vector.shape_cast %94 : vector<1x8x128xf32> to vector<8x128xf32>
    %96 = vector.shape_cast %92 : vector<8x128xf32> to vector<1x8x128xf32>
    tpu.vector_store %arg4[%93, %c0_29, %c0_30], %96 {strides = array<i32>} : memref<8x8x128xf32, #tpu.memory_space<vmem>>, vector<1x8x128xf32>,
    %c3_i32 = arith.constant 3 : i32
    %97 = arith.index_cast %c3_i32 : i32 to index
    %c0_31 = arith.constant 0 : index
    %c0_32 = arith.constant 0 : index
    %98 = vector.load %arg1[%97, %c0_31, %c0_32] : memref<8x8x384xf32, #tpu.memory_space<vmem>>, vector<1x8x384xf32>
    %99 = vector.shape_cast %98 : vector<1x8x384xf32> to vector<8x384xf32>
    %c0_33 = arith.constant 0 : index
    %c0_34 = arith.constant 0 : index
    %100 = vector.load %arg2[%c0_33, %c0_34] : memref<128x384xf32, #tpu.memory_space<vmem>>, vector<128x384xf32>
    %cst_35 = arith.constant dense<0.000000e+00> : vector<8x384xf32>
    %101 = tpu.matmul %92, %100, %cst_35 {dimension_numbers = #tpu.dot_dimension_numbers<[1], [0], [0], [1], [0, 0, 1, 1], [], []>} : vector<8x128xf32>, vector<128x384xf32>, vector<8x384xf32> -> vector<8x384xf32>
    %102 = vector.extract_strided_slice %99 {offsets = [0, 0], sizes = [8, 256], strides = [1, 1]} : vector<8x384xf32> to vector<8x256xf32>
    %103 = vector.extract_strided_slice %101 {offsets = [0, 0], sizes = [8, 256], strides = [1, 1]} : vector<8x384xf32> to vector<8x256xf32>
    %104 = arith.addf %102, %103 : vector<8x256xf32>
    %105 = arith.negf %104 : vector<8x256xf32>
    %106 = math.exp %105 : vector<8x256xf32>
    %cst_36 = arith.constant 1.000000e+00 : f32
    %107 = vector.broadcast %cst_36 : f32 to vector<8x256xf32>
    %108 = arith.addf %107, %106 : vector<8x256xf32>
    %109 = arith.divf %107, %108 : vector<8x256xf32>
    %110 = vector.extract_strided_slice %109 {offsets = [0, 0], sizes = [8, 128], strides = [1, 1]} : vector<8x256xf32> to vector<8x128xf32>
    %111 = vector.extract_strided_slice %109 {offsets = [0, 128], sizes = [8, 128], strides = [1, 1]} : vector<8x256xf32> to vector<8x128xf32>
    %112 = vector.extract_strided_slice %99 {offsets = [0, 256], sizes = [8, 128], strides = [1, 1]} : vector<8x384xf32> to vector<8x128xf32>
    %113 = vector.extract_strided_slice %101 {offsets = [0, 256], sizes = [8, 128], strides = [1, 1]} : vector<8x384xf32> to vector<8x128xf32>
    %114 = arith.addf %113, %5 : vector<8x128xf32>
    %115 = arith.mulf %110, %114 : vector<8x128xf32>
    %116 = arith.addf %112, %115 : vector<8x128xf32>
    %117 = math.tanh %116 : vector<8x128xf32>
    %cst_37 = arith.constant 1.000000e+00 : f32
    %118 = vector.broadcast %cst_37 : f32 to vector<8x128xf32>
    %119 = arith.subf %118, %111 : vector<8x128xf32>
    %120 = arith.mulf %119, %117 : vector<8x128xf32>
    %121 = arith.mulf %111, %92 : vector<8x128xf32>
    %122 = arith.addf %120, %121 : vector<8x128xf32>
    %123 = arith.index_cast %c3_i32 : i32 to index
    %c0_38 = arith.constant 0 : index
    %c0_39 = arith.constant 0 : index
    %124 = vector.load %arg4[%123, %c0_38, %c0_39] : memref<8x8x128xf32, #tpu.memory_space<vmem>>, vector<1x8x128xf32>
    %125 = vector.shape_cast %124 : vector<1x8x128xf32> to vector<8x128xf32>
    %126 = vector.shape_cast %122 : vector<8x128xf32> to vector<1x8x128xf32>
    tpu.vector_store %arg4[%123, %c0_38, %c0_39], %126 {strides = array<i32>} : memref<8x8x128xf32, #tpu.memory_space<vmem>>, vector<1x8x128xf32>,
    %c4_i32 = arith.constant 4 : i32
    %127 = arith.index_cast %c4_i32 : i32 to index
    %c0_40 = arith.constant 0 : index
    %c0_41 = arith.constant 0 : index
    %128 = vector.load %arg1[%127, %c0_40, %c0_41] : memref<8x8x384xf32, #tpu.memory_space<vmem>>, vector<1x8x384xf32>
    %129 = vector.shape_cast %128 : vector<1x8x384xf32> to vector<8x384xf32>
    %c0_42 = arith.constant 0 : index
    %c0_43 = arith.constant 0 : index
    %130 = vector.load %arg2[%c0_42, %c0_43] : memref<128x384xf32, #tpu.memory_space<vmem>>, vector<128x384xf32>
    %cst_44 = arith.constant dense<0.000000e+00> : vector<8x384xf32>
    %131 = tpu.matmul %122, %130, %cst_44 {dimension_numbers = #tpu.dot_dimension_numbers<[1], [0], [0], [1], [0, 0, 1, 1], [], []>} : vector<8x128xf32>, vector<128x384xf32>, vector<8x384xf32> -> vector<8x384xf32>
    %132 = vector.extract_strided_slice %129 {offsets = [0, 0], sizes = [8, 256], strides = [1, 1]} : vector<8x384xf32> to vector<8x256xf32>
    %133 = vector.extract_strided_slice %131 {offsets = [0, 0], sizes = [8, 256], strides = [1, 1]} : vector<8x384xf32> to vector<8x256xf32>
    %134 = arith.addf %132, %133 : vector<8x256xf32>
    %135 = arith.negf %134 : vector<8x256xf32>
    %136 = math.exp %135 : vector<8x256xf32>
    %cst_45 = arith.constant 1.000000e+00 : f32
    %137 = vector.broadcast %cst_45 : f32 to vector<8x256xf32>
    %138 = arith.addf %137, %136 : vector<8x256xf32>
    %139 = arith.divf %137, %138 : vector<8x256xf32>
    %140 = vector.extract_strided_slice %139 {offsets = [0, 0], sizes = [8, 128], strides = [1, 1]} : vector<8x256xf32> to vector<8x128xf32>
    %141 = vector.extract_strided_slice %139 {offsets = [0, 128], sizes = [8, 128], strides = [1, 1]} : vector<8x256xf32> to vector<8x128xf32>
    %142 = vector.extract_strided_slice %129 {offsets = [0, 256], sizes = [8, 128], strides = [1, 1]} : vector<8x384xf32> to vector<8x128xf32>
    %143 = vector.extract_strided_slice %131 {offsets = [0, 256], sizes = [8, 128], strides = [1, 1]} : vector<8x384xf32> to vector<8x128xf32>
    %144 = arith.addf %143, %5 : vector<8x128xf32>
    %145 = arith.mulf %140, %144 : vector<8x128xf32>
    %146 = arith.addf %142, %145 : vector<8x128xf32>
    %147 = math.tanh %146 : vector<8x128xf32>
    %cst_46 = arith.constant 1.000000e+00 : f32
    %148 = vector.broadcast %cst_46 : f32 to vector<8x128xf32>
    %149 = arith.subf %148, %141 : vector<8x128xf32>
    %150 = arith.mulf %149, %147 : vector<8x128xf32>
    %151 = arith.mulf %141, %122 : vector<8x128xf32>
    %152 = arith.addf %150, %151 : vector<8x128xf32>
    %153 = arith.index_cast %c4_i32 : i32 to index
    %c0_47 = arith.constant 0 : index
    %c0_48 = arith.constant 0 : index
    %154 = vector.load %arg4[%153, %c0_47, %c0_48] : memref<8x8x128xf32, #tpu.memory_space<vmem>>, vector<1x8x128xf32>
    %155 = vector.shape_cast %154 : vector<1x8x128xf32> to vector<8x128xf32>
    %156 = vector.shape_cast %152 : vector<8x128xf32> to vector<1x8x128xf32>
    tpu.vector_store %arg4[%153, %c0_47, %c0_48], %156 {strides = array<i32>} : memref<8x8x128xf32, #tpu.memory_space<vmem>>, vector<1x8x128xf32>,
    %c5_i32 = arith.constant 5 : i32
    %157 = arith.index_cast %c5_i32 : i32 to index
    %c0_49 = arith.constant 0 : index
    %c0_50 = arith.constant 0 : index
    %158 = vector.load %arg1[%157, %c0_49, %c0_50] : memref<8x8x384xf32, #tpu.memory_space<vmem>>, vector<1x8x384xf32>
    %159 = vector.shape_cast %158 : vector<1x8x384xf32> to vector<8x384xf32>
    %c0_51 = arith.constant 0 : index
    %c0_52 = arith.constant 0 : index
    %160 = vector.load %arg2[%c0_51, %c0_52] : memref<128x384xf32, #tpu.memory_space<vmem>>, vector<128x384xf32>
    %cst_53 = arith.constant dense<0.000000e+00> : vector<8x384xf32>
    %161 = tpu.matmul %152, %160, %cst_53 {dimension_numbers = #tpu.dot_dimension_numbers<[1], [0], [0], [1], [0, 0, 1, 1], [], []>} : vector<8x128xf32>, vector<128x384xf32>, vector<8x384xf32> -> vector<8x384xf32>
    %162 = vector.extract_strided_slice %159 {offsets = [0, 0], sizes = [8, 256], strides = [1, 1]} : vector<8x384xf32> to vector<8x256xf32>
    %163 = vector.extract_strided_slice %161 {offsets = [0, 0], sizes = [8, 256], strides = [1, 1]} : vector<8x384xf32> to vector<8x256xf32>
    %164 = arith.addf %162, %163 : vector<8x256xf32>
    %165 = arith.negf %164 : vector<8x256xf32>
    %166 = math.exp %165 : vector<8x256xf32>
    %cst_54 = arith.constant 1.000000e+00 : f32
    %167 = vector.broadcast %cst_54 : f32 to vector<8x256xf32>
    %168 = arith.addf %167, %166 : vector<8x256xf32>
    %169 = arith.divf %167, %168 : vector<8x256xf32>
    %170 = vector.extract_strided_slice %169 {offsets = [0, 0], sizes = [8, 128], strides = [1, 1]} : vector<8x256xf32> to vector<8x128xf32>
    %171 = vector.extract_strided_slice %169 {offsets = [0, 128], sizes = [8, 128], strides = [1, 1]} : vector<8x256xf32> to vector<8x128xf32>
    %172 = vector.extract_strided_slice %159 {offsets = [0, 256], sizes = [8, 128], strides = [1, 1]} : vector<8x384xf32> to vector<8x128xf32>
    %173 = vector.extract_strided_slice %161 {offsets = [0, 256], sizes = [8, 128], strides = [1, 1]} : vector<8x384xf32> to vector<8x128xf32>
    %174 = arith.addf %173, %5 : vector<8x128xf32>
    %175 = arith.mulf %170, %174 : vector<8x128xf32>
    %176 = arith.addf %172, %175 : vector<8x128xf32>
    %177 = math.tanh %176 : vector<8x128xf32>
    %cst_55 = arith.constant 1.000000e+00 : f32
    %178 = vector.broadcast %cst_55 : f32 to vector<8x128xf32>
    %179 = arith.subf %178, %171 : vector<8x128xf32>
    %180 = arith.mulf %179, %177 : vector<8x128xf32>
    %181 = arith.mulf %171, %152 : vector<8x128xf32>
    %182 = arith.addf %180, %181 : vector<8x128xf32>
    %183 = arith.index_cast %c5_i32 : i32 to index
    %c0_56 = arith.constant 0 : index
    %c0_57 = arith.constant 0 : index
    %184 = vector.load %arg4[%183, %c0_56, %c0_57] : memref<8x8x128xf32, #tpu.memory_space<vmem>>, vector<1x8x128xf32>
    %185 = vector.shape_cast %184 : vector<1x8x128xf32> to vector<8x128xf32>
    %186 = vector.shape_cast %182 : vector<8x128xf32> to vector<1x8x128xf32>
    tpu.vector_store %arg4[%183, %c0_56, %c0_57], %186 {strides = array<i32>} : memref<8x8x128xf32, #tpu.memory_space<vmem>>, vector<1x8x128xf32>,
    %c6_i32 = arith.constant 6 : i32
    %187 = arith.index_cast %c6_i32 : i32 to index
    %c0_58 = arith.constant 0 : index
    %c0_59 = arith.constant 0 : index
    %188 = vector.load %arg1[%187, %c0_58, %c0_59] : memref<8x8x384xf32, #tpu.memory_space<vmem>>, vector<1x8x384xf32>
    %189 = vector.shape_cast %188 : vector<1x8x384xf32> to vector<8x384xf32>
    %c0_60 = arith.constant 0 : index
    %c0_61 = arith.constant 0 : index
    %190 = vector.load %arg2[%c0_60, %c0_61] : memref<128x384xf32, #tpu.memory_space<vmem>>, vector<128x384xf32>
    %cst_62 = arith.constant dense<0.000000e+00> : vector<8x384xf32>
    %191 = tpu.matmul %182, %190, %cst_62 {dimension_numbers = #tpu.dot_dimension_numbers<[1], [0], [0], [1], [0, 0, 1, 1], [], []>} : vector<8x128xf32>, vector<128x384xf32>, vector<8x384xf32> -> vector<8x384xf32>
    %192 = vector.extract_strided_slice %189 {offsets = [0, 0], sizes = [8, 256], strides = [1, 1]} : vector<8x384xf32> to vector<8x256xf32>
    %193 = vector.extract_strided_slice %191 {offsets = [0, 0], sizes = [8, 256], strides = [1, 1]} : vector<8x384xf32> to vector<8x256xf32>
    %194 = arith.addf %192, %193 : vector<8x256xf32>
    %195 = arith.negf %194 : vector<8x256xf32>
    %196 = math.exp %195 : vector<8x256xf32>
    %cst_63 = arith.constant 1.000000e+00 : f32
    %197 = vector.broadcast %cst_63 : f32 to vector<8x256xf32>
    %198 = arith.addf %197, %196 : vector<8x256xf32>
    %199 = arith.divf %197, %198 : vector<8x256xf32>
    %200 = vector.extract_strided_slice %199 {offsets = [0, 0], sizes = [8, 128], strides = [1, 1]} : vector<8x256xf32> to vector<8x128xf32>
    %201 = vector.extract_strided_slice %199 {offsets = [0, 128], sizes = [8, 128], strides = [1, 1]} : vector<8x256xf32> to vector<8x128xf32>
    %202 = vector.extract_strided_slice %189 {offsets = [0, 256], sizes = [8, 128], strides = [1, 1]} : vector<8x384xf32> to vector<8x128xf32>
    %203 = vector.extract_strided_slice %191 {offsets = [0, 256], sizes = [8, 128], strides = [1, 1]} : vector<8x384xf32> to vector<8x128xf32>
    %204 = arith.addf %203, %5 : vector<8x128xf32>
    %205 = arith.mulf %200, %204 : vector<8x128xf32>
    %206 = arith.addf %202, %205 : vector<8x128xf32>
    %207 = math.tanh %206 : vector<8x128xf32>
    %cst_64 = arith.constant 1.000000e+00 : f32
    %208 = vector.broadcast %cst_64 : f32 to vector<8x128xf32>
    %209 = arith.subf %208, %201 : vector<8x128xf32>
    %210 = arith.mulf %209, %207 : vector<8x128xf32>
    %211 = arith.mulf %201, %182 : vector<8x128xf32>
    %212 = arith.addf %210, %211 : vector<8x128xf32>
    %213 = arith.index_cast %c6_i32 : i32 to index
    %c0_65 = arith.constant 0 : index
    %c0_66 = arith.constant 0 : index
    %214 = vector.load %arg4[%213, %c0_65, %c0_66] : memref<8x8x128xf32, #tpu.memory_space<vmem>>, vector<1x8x128xf32>
    %215 = vector.shape_cast %214 : vector<1x8x128xf32> to vector<8x128xf32>
    %216 = vector.shape_cast %212 : vector<8x128xf32> to vector<1x8x128xf32>
    tpu.vector_store %arg4[%213, %c0_65, %c0_66], %216 {strides = array<i32>} : memref<8x8x128xf32, #tpu.memory_space<vmem>>, vector<1x8x128xf32>,
    %c7_i32 = arith.constant 7 : i32
    %217 = arith.index_cast %c7_i32 : i32 to index
    %c0_67 = arith.constant 0 : index
    %c0_68 = arith.constant 0 : index
    %218 = vector.load %arg1[%217, %c0_67, %c0_68] : memref<8x8x384xf32, #tpu.memory_space<vmem>>, vector<1x8x384xf32>
    %219 = vector.shape_cast %218 : vector<1x8x384xf32> to vector<8x384xf32>
    %c0_69 = arith.constant 0 : index
    %c0_70 = arith.constant 0 : index
    %220 = vector.load %arg2[%c0_69, %c0_70] : memref<128x384xf32, #tpu.memory_space<vmem>>, vector<128x384xf32>
    %cst_71 = arith.constant dense<0.000000e+00> : vector<8x384xf32>
    %221 = tpu.matmul %212, %220, %cst_71 {dimension_numbers = #tpu.dot_dimension_numbers<[1], [0], [0], [1], [0, 0, 1, 1], [], []>} : vector<8x128xf32>, vector<128x384xf32>, vector<8x384xf32> -> vector<8x384xf32>
    %222 = vector.extract_strided_slice %219 {offsets = [0, 0], sizes = [8, 256], strides = [1, 1]} : vector<8x384xf32> to vector<8x256xf32>
    %223 = vector.extract_strided_slice %221 {offsets = [0, 0], sizes = [8, 256], strides = [1, 1]} : vector<8x384xf32> to vector<8x256xf32>
    %224 = arith.addf %222, %223 : vector<8x256xf32>
    %225 = arith.negf %224 : vector<8x256xf32>
    %226 = math.exp %225 : vector<8x256xf32>
    %cst_72 = arith.constant 1.000000e+00 : f32
    %227 = vector.broadcast %cst_72 : f32 to vector<8x256xf32>
    %228 = arith.addf %227, %226 : vector<8x256xf32>
    %229 = arith.divf %227, %228 : vector<8x256xf32>
    %230 = vector.extract_strided_slice %229 {offsets = [0, 0], sizes = [8, 128], strides = [1, 1]} : vector<8x256xf32> to vector<8x128xf32>
    %231 = vector.extract_strided_slice %229 {offsets = [0, 128], sizes = [8, 128], strides = [1, 1]} : vector<8x256xf32> to vector<8x128xf32>
    %232 = vector.extract_strided_slice %219 {offsets = [0, 256], sizes = [8, 128], strides = [1, 1]} : vector<8x384xf32> to vector<8x128xf32>
    %233 = vector.extract_strided_slice %221 {offsets = [0, 256], sizes = [8, 128], strides = [1, 1]} : vector<8x384xf32> to vector<8x128xf32>
    %234 = arith.addf %233, %5 : vector<8x128xf32>
    %235 = arith.mulf %230, %234 : vector<8x128xf32>
    %236 = arith.addf %232, %235 : vector<8x128xf32>
    %237 = math.tanh %236 : vector<8x128xf32>
    %cst_73 = arith.constant 1.000000e+00 : f32
    %238 = vector.broadcast %cst_73 : f32 to vector<8x128xf32>
    %239 = arith.subf %238, %231 : vector<8x128xf32>
    %240 = arith.mulf %239, %237 : vector<8x128xf32>
    %241 = arith.mulf %231, %212 : vector<8x128xf32>
    %242 = arith.addf %240, %241 : vector<8x128xf32>
    %243 = arith.index_cast %c7_i32 : i32 to index
    %c0_74 = arith.constant 0 : index
    %c0_75 = arith.constant 0 : index
    %244 = vector.load %arg4[%243, %c0_74, %c0_75] : memref<8x8x128xf32, #tpu.memory_space<vmem>>, vector<1x8x128xf32>
    %245 = vector.shape_cast %244 : vector<1x8x128xf32> to vector<8x128xf32>
    %246 = vector.shape_cast %242 : vector<8x128xf32> to vector<1x8x128xf32>
    tpu.vector_store %arg4[%243, %c0_74, %c0_75], %246 {strides = array<i32>} : memref<8x8x128xf32, #tpu.memory_space<vmem>>, vector<1x8x128xf32>,
    %c8_i32 = arith.constant 8 : i32
    %c0_76 = arith.constant 0 : index
    %c0_77 = arith.constant 0 : index
    %247 = vector.load %arg5[%c0_76, %c0_77] : memref<8x128xf32, #tpu.memory_space<vmem>>, vector<8x128xf32>
    tpu.vector_store %arg5[%c0_76, %c0_77], %242 {strides = array<i32>} : memref<8x128xf32, #tpu.memory_space<vmem>>, vector<8x128xf32>,
    return
  }
  func.func @transform_0(%arg0: i32) -> (i32, i32, i32) {
    %c0_i32 = arith.constant 0 : i32
    %c0_i32_0 = arith.constant 0 : i32
    %c0_i32_1 = arith.constant 0 : i32
    return %arg0, %c0_i32, %c0_i32_0 : i32, i32, i32
  }
  func.func @transform_1(%arg0: i32) -> (i32, i32) {
    %c0_i32 = arith.constant 0 : i32
    %c0_i32_0 = arith.constant 0 : i32
    %c0_i32_1 = arith.constant 0 : i32
    return %c0_i32, %c0_i32_0 : i32, i32
  }
  func.func @transform_2(%arg0: i32) -> (i32, i32) {
    %c0_i32 = arith.constant 0 : i32
    %c0_i32_0 = arith.constant 0 : i32
    %c0_i32_1 = arith.constant 0 : i32
    return %c0_i32, %c0_i32_0 : i32, i32
  }
  func.func @transform_3(%arg0: i32) -> (i32, i32, i32) {
    %c0_i32 = arith.constant 0 : i32
    %c0_i32_0 = arith.constant 0 : i32
    %c0_i32_1 = arith.constant 0 : i32
    return %arg0, %c0_i32, %c0_i32_0 : i32, i32, i32
  }
}

</mosaic_0001>

<llo_original>
// kernel: tpu_custom_call.1
$region0: #{tpu_custom_call.1}
  #allocation0 [shape = 'u32[]', space=smem, size = 0x4, offset = 0x4, fixed_abs, tag = 'smem constant byte address 0x4 - core index']
  #allocation1 [shape = 'u32[144,128]{1,0:T(1,128)}', space=vmem, size = 0x12000, scoped, tag = 'internal scratch']
  #allocation2 [shape = 'f32[8,128]{1,0:T(8,128)}', space=vmem, size = 0x1000, scoped, tag = 'scratch operand']
  %s0 = inlined_call_operand.hbm [shape: f32[8,8,384], index: 0, kind: input, shape index: {}]
  %s1 = inlined_call_operand.hbm [shape: f32[128,384], index: 1, kind: input, shape index: {}]
  %s2 = inlined_call_operand.vmem [shape: f32[1,128], index: 2, kind: input, shape index: {}]
  %s3 = inlined_call_operand.hbm [shape: f32[8,8,128], index: 3, kind: output, shape index: {}]
  %s4 = sld [smem:[#allocation0]]
  $region34: #{tpu_custom_call.1} parent=0
    _
  %s6 = ssub.s32 1, %s4
  %s7 = scalar_select 0, %s6, %s4
  $region1: #{tpu_custom_call.1} parent=0
    #allocation3 [shape = 'u8[98304]{0}', space=vmem, size = 0x18000, scoped, tag = 'input window, operand 0, single buffered']
    #allocation4 [shape = 's32[1]{0}', space=sflag, size = 0x4, scoped, tag = 'scoped memory for tpu_custom_call.1']
    #allocation5 [shape = 's32[1]{0}', space=sflag, size = 0x4, scoped, tag = 'scoped memory for tpu_custom_call.1']
    #allocation6 [shape = 'u8[196608]{0}', space=vmem, size = 0x30000, scoped, tag = 'input window, operand 1, single buffered']
    #allocation7 [shape = 's32[1]{0}', space=sflag, size = 0x4, scoped, tag = 'scoped memory for tpu_custom_call.1']
    #allocation8 [shape = 'u8[32768]{0}', space=vmem, size = 0x8000, scoped, tag = 'output window, operand 0, single buffered']
    %8 = vsyncpa [#allocation4], 0
    %9 = vsyncpa [#allocation7], 0
    %10 = vsyncpa [#allocation5], 0
    // Predicated region
    $region2: #{tpu_custom_call.1} parent=1 // pred_check
      _
    $region3: #{tpu_custom_call.1} parent=1 // pred_check_branch
      %12 = sbr.rel (0) target = $region5
    $region4: #{tpu_custom_call.1} parent=1 // pred_region
      %s14 = ssub.s32 3072, 3072
      %15 = vsyncadd [#allocation4], %s14
      %s16 = sshll.u32 [#allocation3], 4
      %s17 = int_to_ptr.vmem [resolvable:$true] %s16
      %22 = dma.hbm_to_vmem [thread:$0]  %s0, 3072, %s17, [#allocation4], 384, 384, 24
    $region5: #{tpu_custom_call.1} parent=1 // pred_fallthru
      _
    // Predicated region
    $region6: #{tpu_custom_call.1} parent=1 // pred_check
      _
    $region7: #{tpu_custom_call.1} parent=1 // pred_check_branch
      %24 = sbr.rel (0) target = $region9
    $region8: #{tpu_custom_call.1} parent=1 // pred_region
      %s26 = ssub.s32 6144, 6144
      %27 = vsyncadd [#allocation7], %s26
      %s28 = sshll.u32 [#allocation6], 4
      %s29 = int_to_ptr.vmem [resolvable:$true] %s28
      %34 = dma.hbm_to_vmem [thread:$0]  %s1, 6144, %s29, [#allocation7], 384, 384, 24
    $region9: #{tpu_custom_call.1} parent=1 // pred_fallthru
      _
    // Predicated region
    $region10: #{tpu_custom_call.1} parent=1 // pred_check
      _
    $region11: #{tpu_custom_call.1} parent=1 // pred_check_branch
      %36 = sbr.rel (0) target = $region13
    $region12: #{tpu_custom_call.1} parent=1 // pred_region
      _
    $region13: #{tpu_custom_call.1} parent=1 // pred_fallthru
      _
    // Predicated region
    $region14: #{tpu_custom_call.1} parent=1 // pred_check
      _
    $region15: #{tpu_custom_call.1} parent=1 // pred_check_branch
      %38 = sbr.rel (0) target = $region17
    $region16: #{tpu_custom_call.1} parent=1 // pred_region
      %39 = dma.done [#allocation4], 3072
    $region17: #{tpu_custom_call.1} parent=1 // pred_fallthru
      _
    // Predicated region
    $region18: #{tpu_custom_call.1} parent=1 // pred_check
      _
    $region19: #{tpu_custom_call.1} parent=1 // pred_check_branch
      %41 = sbr.rel (0) target = $region21
    $region20: #{tpu_custom_call.1} parent=1 // pred_region
      %42 = dma.done [#allocation7], 6144
    $region21: #{tpu_custom_call.1} parent=1 // pred_fallthru
      _
    %p43 = scmp.eq.s32.totalorder 0, 0
    // Predicated region
    $region22: #{tpu_custom_call.1} parent=1 // pred_check
      %p44 = pneg %p43
    $region23: #{tpu_custom_call.1} parent=1 // pred_check_branch
      %46 = sbr.rel (%p44) target = $region25
    $region24: #{tpu_custom_call.1} parent=1 // pred_region
      %47 = vst [vmem:[#allocation2] sm:$0xff] 0.0
    $region25: #{tpu_custom_call.1} parent=1 // pred_fallthru
      _
    %v48 = vld [vmem:[%s2] sm:$0x1]
    %v50 = vlaneseq
    %v51 = vshrl.u32 %v50, 7
    %v52 = vsub.s32 0, %v51
    %v53 = vrot.slane %v48, %v52
    %v55 = vld [vmem:[#allocation2] sm:$0xff]
    %v56 = vld [vmem:[#allocation3] sm:$0xff]
    %v57 = vld [vmem:[#allocation3 + $0x8] sm:$0xff]
    %v58 = vld [vmem:[#allocation3 + $0x10] sm:$0xff]
    %v59 = vld [vmem:[#allocation6] sm:$0xff]
    %v60 = vld [vmem:[#allocation6 + $0x8] sm:$0xff]
    %v61 = vld [vmem:[#allocation6 + $0x10] sm:$0xff]
    %v62 = vld [vmem:[#allocation6 + $0x18] sm:$0xff]
    %v63 = vld [vmem:[#allocation6 + $0x20] sm:$0xff]
    %v64 = vld [vmem:[#allocation6 + $0x28] sm:$0xff]
    %v65 = vld [vmem:[#allocation6 + $0x30] sm:$0xff]
    %v66 = vld [vmem:[#allocation6 + $0x38] sm:$0xff]
    %v67 = vld [vmem:[#allocation6 + $0x40] sm:$0xff]
    %v68 = vld [vmem:[#allocation6 + $0x48] sm:$0xff]
    %v69 = vld [vmem:[#allocation6 + $0x50] sm:$0xff]
    %v70 = vld [vmem:[#allocation6 + $0x58] sm:$0xff]
    %v71 = vld [vmem:[#allocation6 + $0x60] sm:$0xff]
    %v72 = vld [vmem:[#allocation6 + $0x68] sm:$0xff]
    %v73 = vld [vmem:[#allocation6 + $0x70] sm:$0xff]
    %v74 = vld [vmem:[#allocation6 + $0x78] sm:$0xff]
    %v75 = vld [vmem:[#allocation6 + $0x80] sm:$0xff]
    %v76 = vld [vmem:[#allocation6 + $0x88] sm:$0xff]
    %v77 = vld [vmem:[#allocation6 + $0x90] sm:$0xff]
    %v78 = vld [vmem:[#allocation6 + $0x98] sm:$0xff]
    %v79 = vld [vmem:[#allocation6 + $0xa0] sm:$0xff]
    %v80 = vld [vmem:[#allocation6 + $0xa8] sm:$0xff]
    %v81 = vld [vmem:[#allocation6 + $0xb0] sm:$0xff]
    %v82 = vld [vmem:[#allocation6 + $0xb8] sm:$0xff]
    %v83 = vld [vmem:[#allocation6 + $0xc0] sm:$0xff]
    %v84 = vld [vmem:[#allocation6 + $0xc8] sm:$0xff]
    %v85 = vld [vmem:[#allocation6 + $0xd0] sm:$0xff]
    %v86 = vld [vmem:[#allocation6 + $0xd8] sm:$0xff]
    %v87 = vld [vmem:[#allocation6 + $0xe0] sm:$0xff]
    %v88 = vld [vmem:[#allocation6 + $0xe8] sm:$0xff]
    %v89 = vld [vmem:[#allocation6 + $0xf0] sm:$0xff]
    %v90 = vld [vmem:[#allocation6 + $0xf8] sm:$0xff]
    %v91 = vld [vmem:[#allocation6 + $0x100] sm:$0xff]
    %v92 = vld [vmem:[#allocation6 + $0x108] sm:$0xff]
    %v93 = vld [vmem:[#allocation6 + $0x110] sm:$0xff]
    %v94 = vld [vmem:[#allocation6 + $0x118] sm:$0xff]
    %v95 = vld [vmem:[#allocation6 + $0x120] sm:$0xff]
    %v96 = vld [vmem:[#allocation6 + $0x128] sm:$0xff]
    %v97 = vld [vmem:[#allocation6 + $0x130] sm:$0xff]
    %v98 = vld [vmem:[#allocation6 + $0x138] sm:$0xff]
    %v99 = vld [vmem:[#allocation6 + $0x140] sm:$0xff]
    %v100 = vld [vmem:[#allocation6 + $0x148] sm:$0xff]
    %v101 = vld [vmem:[#allocation6 + $0x150] sm:$0xff]
    %v102 = vld [vmem:[#allocation6 + $0x158] sm:$0xff]
    %v103 = vld [vmem:[#allocation6 + $0x160] sm:$0xff]
    %v104 = vld [vmem:[#allocation6 + $0x168] sm:$0xff]
    %v105 = vld [vmem:[#allocation6 + $0x170] sm:$0xff]
    %v106 = vld [vmem:[#allocation6 + $0x178] sm:$0xff]
    %107 = vmatprep.subr.mxu0 %v60
    %108 = vmatpush1.msra.mxu0 %v59
    %109 = vmatprep.subr.mxu0 %v63
    %110 = vmatpush1.msra.mxu0 %v62
    %111 = vmatprep.subr.mxu0 %v66
    %112 = vmatpush1.msra.mxu0 %v65
    %113 = vmatprep.subr.mxu0 %v69
    %114 = vmatpush1.msra.mxu0 %v68
    %115 = vmatprep.subr.mxu0 %v72
    %116 = vmatpush1.msra.mxu0 %v71
    %117 = vmatprep.subr.mxu0 %v75
    %118 = vmatpush1.msra.mxu0 %v74
    %119 = vmatprep.subr.mxu0 %v78
    %120 = vmatpush1.msra.mxu0 %v77
    %121 = vmatprep.subr.mxu0 %v81
    %122 = vmatpush1.msra.mxu0 %v80
    %123 = vmatprep.subr.mxu0 %v84
    %124 = vmatpush1.msra.mxu0 %v83
    %125 = vmatprep.subr.mxu0 %v87
    %126 = vmatpush1.msra.mxu0 %v86
    %127 = vmatprep.subr.mxu0 %v90
    %128 = vmatpush1.msra.mxu0 %v89
    %129 = vmatprep.subr.mxu0 %v93
    %130 = vmatpush1.msra.mxu0 %v92
    %131 = vmatprep.subr.mxu0 %v96
    %132 = vmatpush1.msra.mxu0 %v95
    %133 = vmatprep.subr.mxu0 %v99
    %134 = vmatpush1.msra.mxu0 %v98
    %135 = vmatprep.subr.mxu0 %v102
    %136 = vmatpush1.msra.mxu0 %v101
    %137 = vmatprep.subr.mxu0 %v105
    %138 = vmatpush1.msra.mxu0 %v104
    %139 = vmatprep.subr.mxu0 0.0
    %140 = vmatpush1.msra.mxu0 0.0
    %141 = vmatprep.subr.mxu0 0.0
    %142 = vmatpush1.msra.mxu0 0.0
    %143 = vmatprep.subr.mxu0 0.0
    %144 = vmatpush1.msra.mxu0 0.0
    %145 = vmatprep.subr.mxu0 0.0
    %146 = vmatpush1.msra.mxu0 0.0
    %147 = vmatprep.subr.mxu0 0.0
    %148 = vmatpush1.msra.mxu0 0.0
    %149 = vmatprep.subr.mxu0 0.0
    %150 = vmatpush1.msra.mxu0 0.0
    %151 = vmatprep.subr.mxu0 0.0
    %152 = vmatpush1.msra.mxu0 0.0
    %153 = vmatprep.subr.mxu0 0.0
    %154 = vmatpush1.msra.mxu0 0.0
    %155 = vmatprep.subr.mxu0 0.0
    %156 = vmatpush1.msra.mxu0 0.0
    %157 = vmatprep.subr.mxu0 0.0
    %158 = vmatpush1.msra.mxu0 0.0
    %159 = vmatprep.subr.mxu0 0.0
    %160 = vmatpush1.msra.mxu0 0.0
    %161 = vmatprep.subr.mxu0 0.0
    %162 = vmatpush1.msra.mxu0 0.0
    %163 = vmatprep.subr.mxu0 0.0
    %164 = vmatpush1.msra.mxu0 0.0
    %165 = vmatprep.subr.mxu0 0.0
    %166 = vmatpush1.msra.mxu0 0.0
    %167 = vmatprep.subr.mxu0 0.0
    %168 = vmatpush1.msra.mxu0 0.0
    %169 = vmatprep.subr.mxu0 0.0
    %170 = vmatpush1.msra.mxu0 0.0
    %171 = vmatprep.mubr.f32.mxu0 0.0
    %172 = vmatmul.mubr.f32.gmra.mrb[0].mxu0 %v55
    %v173 = vpop.f32.mrb[0].mxu0
    %v174 = vadd.f32 0.0, %v173
    %v175 = vpop.f32.mrb[0].mxu0
    %v176 = vadd.f32 0.0, %v175
    %177 = vdwg.mxu0
    %178 = vmatprep.subr.mxu0 0.0
    %179 = vmatpush1.msra.mxu0 %v61
    %180 = vmatprep.subr.mxu0 0.0
    %181 = vmatpush1.msra.mxu0 %v64
    %182 = vmatprep.subr.mxu0 0.0
    %183 = vmatpush1.msra.mxu0 %v67
    %184 = vmatprep.subr.mxu0 0.0
    %185 = vmatpush1.msra.mxu0 %v70
    %186 = vmatprep.subr.mxu0 0.0
    %187 = vmatpush1.msra.mxu0 %v73
    %188 = vmatprep.subr.mxu0 0.0
    %189 = vmatpush1.msra.mxu0 %v76
    %190 = vmatprep.subr.mxu0 0.0
    %191 = vmatpush1.msra.mxu0 %v79
    %192 = vmatprep.subr.mxu0 0.0
    %193 = vmatpush1.msra.mxu0 %v82
    %194 = vmatprep.subr.mxu0 0.0
    %195 = vmatpush1.msra.mxu0 %v85
    %196 = vmatprep.subr.mxu0 0.0
    %197 = vmatpush1.msra.mxu0 %v88
    %198 = vmatprep.subr.mxu0 0.0
    %199 = vmatpush1.msra.mxu0 %v91
    %200 = vmatprep.subr.mxu0 0.0
    %201 = vmatpush1.msra.mxu0 %v94
    %202 = vmatprep.subr.mxu0 0.0
    %203 = vmatpush1.msra.mxu0 %v97
    %204 = vmatprep.subr.mxu0 0.0
    %205 = vmatpush1.msra.mxu0 %v100
    %206 = vmatprep.subr.mxu0 0.0
    %207 = vmatpush1.msra.mxu0 %v103
    %208 = vmatprep.subr.mxu0 0.0
    %209 = vmatpush1.msra.mxu0 %v106
    %210 = vmatprep.subr.mxu0 0.0
    %211 = vmatpush1.msra.mxu0 0.0
    %212 = vmatprep.subr.mxu0 0.0
    %213 = vmatpush1.msra.mxu0 0.0
    %214 = vmatprep.subr.mxu0 0.0
    %215 = vmatpush1.msra.mxu0 0.0
    %216 = vmatprep.subr.mxu0 0.0
    %217 = vmatpush1.msra.mxu0 0.0
    %218 = vmatprep.subr.mxu0 0.0
    %219 = vmatpush1.msra.mxu0 0.0
    %220 = vmatprep.subr.mxu0 0.0
    %221 = vmatpush1.msra.mxu0 0.0
    %222 = vmatprep.subr.mxu0 0.0
    %223 = vmatpush1.msra.mxu0 0.0
    %224 = vmatprep.subr.mxu0 0.0
    %225 = vmatpush1.msra.mxu0 0.0
    %226 = vmatprep.subr.mxu0 0.0
    %227 = vmatpush1.msra.mxu0 0.0
    %228 = vmatprep.subr.mxu0 0.0
    %229 = vmatpush1.msra.mxu0 0.0
    %230 = vmatprep.subr.mxu0 0.0
    %231 = vmatpush1.msra.mxu0 0.0
    %232 = vmatprep.subr.mxu0 0.0
    %233 = vmatpush1.msra.mxu0 0.0
    %234 = vmatprep.subr.mxu0 0.0
    %235 = vmatpush1.msra.mxu0 0.0
    %236 = vmatprep.subr.mxu0 0.0
    %237 = vmatpush1.msra.mxu0 0.0
    %238 = vmatprep.subr.mxu0 0.0
    %239 = vmatpush1.msra.mxu0 0.0
    %240 = vmatprep.subr.mxu0 0.0
    %241 = vmatpush1.msra.mxu0 0.0
    %242 = vmatprep.mubr.f32.mxu0 0.0
    %243 = vmatmul.mubr.f32.gmra.mrb[0].mxu0 %v55
    %v244 = vpop.f32.mrb[0].mxu0
    %v245 = vadd.f32 0.0, %v244
    %v246 = vpop.f32.mrb[0].mxu0
    %247 = vdwg.mxu0
    %v248 = vadd.f32 %v56, %v174
    %v249 = vadd.f32 %v57, %v176
    %v250 = vxor.u32 %v248, 2147483648
    %v251 = vxor.u32 %v249, 2147483648
    %v252 = vmul.f32 %v250, 1.442695
    %v253 = vpow.pop %v252
    %v254 = vmul.f32 %v251, 1.442695
    %v255 = vpow.pop %v254
    %v256 = vadd.f32 %v253, 1.0
    %v257 = vadd.f32 %v255, 1.0
    %v258 = vrcp.pop %v256
    %v259 = vmul.f32 1.0, %v258
    %v260 = vrcp.pop %v257
    %v261 = vmul.f32 1.0, %v260
    %v262 = vadd.f32 %v245, %v53
    %v263 = vmul.f32 %v259, %v262
    %v264 = vadd.f32 %v58, %v263
    %v265 = vtanh.pop %v264
    %v266 = vsub.f32 1.0, %v261
    %v267 = vmul.f32 %v266, %v265
    %v268 = vmul.f32 %v261, %v55
    %v269 = vadd.f32 %v267, %v268
    %270 = vst [vmem:[#allocation8] sm:$0xff] %v269
    %s271 = scalar_lea.vmem [#allocation3], 24
    %v272 = vld [vmem:[%s271] sm:$0xff]
    %v273 = vld [vmem:[%s271 + $0x8] sm:$0xff]
    %v274 = vld [vmem:[%s271 + $0x10] sm:$0xff]
    %v275 = vld [vmem:[#allocation6] sm:$0xff]
    %v276 = vld [vmem:[#allocation6 + $0x8] sm:$0xff]
    %v277 = vld [vmem:[#allocation6 + $0x10] sm:$0xff]
    %v278 = vld [vmem:[#allocation6 + $0x18] sm:$0xff]
    %v279 = vld [vmem:[#allocation6 + $0x20] sm:$0xff]
    %v280 = vld [vmem:[#allocation6 + $0x28] sm:$0xff]
    %v281 = vld [vmem:[#allocation6 + $0x30] sm:$0xff]
    %v282 = vld [vmem:[#allocation6 + $0x38] sm:$0xff]
    %v283 = vld [vmem:[#allocation6 + $0x40] sm:$0xff]
    %v284 = vld [vmem:[#allocation6 + $0x48] sm:$0xff]
    %v285 = vld [vmem:[#allocation6 + $0x50] sm:$0xff]
    %v286 = vld [vmem:[#allocation6 + $0x58] sm:$0xff]
    %v287 = vld [vmem:[#allocation6 + $0x60] sm:$0xff]
    %v288 = vld [vmem:[#allocation6 + $0x68] sm:$0xff]
    %v289 = vld [vmem:[#allocation6 + $0x70] sm:$0xff]
    %v290 = vld [vmem:[#allocation6 + $0x78] sm:$0xff]
    %v291 = vld [vmem:[#allocation6 + $0x80] sm:$0xff]
    %v292 = vld [vmem:[#allocation6 + $0x88] sm:$0xff]
    %v293 = vld [vmem:[#allocation6 + $0x90] sm:$0xff]
    %v294 = vld [vmem:[#allocation6 + $0x98] sm:$0xff]
    %v295 = vld [vmem:[#allocation6 + $0xa0] sm:$0xff]
    %v296 = vld [vmem:[#allocation6 + $0xa8] sm:$0xff]
    %v297 = vld [vmem:[#allocation6 + $0xb0] sm:$0xff]
    %v298 = vld [vmem:[#allocation6 + $0xb8] sm:$0xff]
    %v299 = vld [vmem:[#allocation6 + $0xc0] sm:$0xff]
    %v300 = vld [vmem:[#allocation6 + $0xc8] sm:$0xff]
    %v301 = vld [vmem:[#allocation6 + $0xd0] sm:$0xff]
    %v302 = vld [vmem:[#allocation6 + $0xd8] sm:$0xff]
    %v303 = vld [vmem:[#allocation6 + $0xe0] sm:$0xff]
    %v304 = vld [vmem:[#allocation6 + $0xe8] sm:$0xff]
    %v305 = vld [vmem:[#allocation6 + $0xf0] sm:$0xff]
    %v306 = vld [vmem:[#allocation6 + $0xf8] sm:$0xff]
    %v307 = vld [vmem:[#allocation6 + $0x100] sm:$0xff]
    %v308 = vld [vmem:[#allocation6 + $0x108] sm:$0xff]
    %v309 = vld [vmem:[#allocation6 + $0x110] sm:$0xff]
    %v310 = vld [vmem:[#allocation6 + $0x118] sm:$0xff]
    %v311 = vld [vmem:[#allocation6 + $0x120] sm:$0xff]
    %v312 = vld [vmem:[#allocation6 + $0x128] sm:$0xff]
    %v313 = vld [vmem:[#allocation6 + $0x130] sm:$0xff]
    %v314 = vld [vmem:[#allocation6 + $0x138] sm:$0xff]
    %v315 = vld [vmem:[#allocation6 + $0x140] sm:$0xff]
    %v316 = vld [vmem:[#allocation6 + $0x148] sm:$0xff]
    %v317 = vld [vmem:[#allocation6 + $0x150] sm:$0xff]
    %v318 = vld [vmem:[#allocation6 + $0x158] sm:$0xff]
    %v319 = vld [vmem:[#allocation6 + $0x160] sm:$0xff]
    %v320 = vld [vmem:[#allocation6 + $0x168] sm:$0xff]
    %v321 = vld [vmem:[#allocation6 + $0x170] sm:$0xff]
    %v322 = vld [vmem:[#allocation6 + $0x178] sm:$0xff]
    %323 = vmatprep.subr.mxu0 %v276
    %324 = vmatpush1.msra.mxu0 %v275
    %325 = vmatprep.subr.mxu0 %v279
    %326 = vmatpush1.msra.mxu0 %v278
    %327 = vmatprep.subr.mxu0 %v282
    %328 = vmatpush1.msra.mxu0 %v281
    %329 = vmatprep.subr.mxu0 %v285
    %330 = vmatpush1.msra.mxu0 %v284
    %331 = vmatprep.subr.mxu0 %v288
    %332 = vmatpush1.msra.mxu0 %v287
    %333 = vmatprep.subr.mxu0 %v291
    %334 = vmatpush1.msra.mxu0 %v290
    %335 = vmatprep.subr.mxu0 %v294
    %336 = vmatpush1.msra.mxu0 %v293
    %337 = vmatprep.subr.mxu0 %v297
    %338 = vmatpush1.msra.mxu0 %v296
    %339 = vmatprep.subr.mxu0 %v300
    %340 = vmatpush1.msra.mxu0 %v299
    %341 = vmatprep.subr.mxu0 %v303
    %342 = vmatpush1.msra.mxu0 %v302
    %343 = vmatprep.subr.mxu0 %v306
    %344 = vmatpush1.msra.mxu0 %v305
    %345 = vmatprep.subr.mxu0 %v309
    %346 = vmatpush1.msra.mxu0 %v308
    %347 = vmatprep.subr.mxu0 %v312
    %348 = vmatpush1.msra.mxu0 %v311
    %349 = vmatprep.subr.mxu0 %v315
    %350 = vmatpush1.msra.mxu0 %v314
    %351 = vmatprep.subr.mxu0 %v318
    %352 = vmatpush1.msra.mxu0 %v317
    %353 = vmatprep.subr.mxu0 %v321
    %354 = vmatpush1.msra.mxu0 %v320
    %355 = vmatprep.subr.mxu0 0.0
    %356 = vmatpush1.msra.mxu0 0.0
    %357 = vmatprep.subr.mxu0 0.0
    %358 = vmatpush1.msra.mxu0 0.0
    %359 = vmatprep.subr.mxu0 0.0
    %360 = vmatpush1.msra.mxu0 0.0
    %361 = vmatprep.subr.mxu0 0.0
    %362 = vmatpush1.msra.mxu0 0.0
    %363 = vmatprep.subr.mxu0 0.0
    %364 = vmatpush1.msra.mxu0 0.0
    %365 = vmatprep.subr.mxu0 0.0
    %366 = vmatpush1.msra.mxu0 0.0
    %367 = vmatprep.subr.mxu0 0.0
    %368 = vmatpush1.msra.mxu0 0.0
    %369 = vmatprep.subr.mxu0 0.0
    %370 = vmatpush1.msra.mxu0 0.0
    %371 = vmatprep.subr.mxu0 0.0
    %372 = vmatpush1.msra.mxu0 0.0
    %373 = vmatprep.subr.mxu0 0.0
    %374 = vmatpush1.msra.mxu0 0.0
    %375 = vmatprep.subr.mxu0 0.0
    %376 = vmatpush1.msra.mxu0 0.0
    %377 = vmatprep.subr.mxu0 0.0
    %378 = vmatpush1.msra.mxu0 0.0
    %379 = vmatprep.subr.mxu0 0.0
    %380 = vmatpush1.msra.mxu0 0.0
    %381 = vmatprep.subr.mxu0 0.0
    %382 = vmatpush1.msra.mxu0 0.0
    %383 = vmatprep.subr.mxu0 0.0
    %384 = vmatpush1.msra.mxu0 0.0
    %385 = vmatprep.subr.mxu0 0.0
    %386 = vmatpush1.msra.mxu0 0.0
    %387 = vmatprep.mubr.f32.mxu0 0.0
    %388 = vmatmul.mubr.f32.gmra.mrb[0].mxu0 %v269
    %v389 = vpop.f32.mrb[0].mxu0
    %v390 = vadd.f32 0.0, %v389
    %v391 = vpop.f32.mrb[0].mxu0
    %v392 = vadd.f32 0.0, %v391
    %393 = vdwg.mxu0
    %394 = vmatprep.subr.mxu0 0.0
    %395 = vmatpush1.msra.mxu0 %v277
    %396 = vmatprep.subr.mxu0 0.0
    %397 = vmatpush1.msra.mxu0 %v280
    %398 = vmatprep.subr.mxu0 0.0
    %399 = vmatpush1.msra.mxu0 %v283
    %400 = vmatprep.subr.mxu0 0.0
    %401 = vmatpush1.msra.mxu0 %v286
    %402 = vmatprep.subr.mxu0 0.0
    %403 = vmatpush1.msra.mxu0 %v289
    %404 = vmatprep.subr.mxu0 0.0
    %405 = vmatpush1.msra.mxu0 %v292
    %406 = vmatprep.subr.mxu0 0.0
    %407 = vmatpush1.msra.mxu0 %v295
    %408 = vmatprep.subr.mxu0 0.0
    %409 = vmatpush1.msra.mxu0 %v298
    %410 = vmatprep.subr.mxu0 0.0
    %411 = vmatpush1.msra.mxu0 %v301
    %412 = vmatprep.subr.mxu0 0.0
    %413 = vmatpush1.msra.mxu0 %v304
    %414 = vmatprep.subr.mxu0 0.0
    %415 = vmatpush1.msra.mxu0 %v307
    %416 = vmatprep.subr.mxu0 0.0
    %417 = vmatpush1.msra.mxu0 %v310
    %418 = vmatprep.subr.mxu0 0.0
    %419 = vmatpush1.msra.mxu0 %v313
    %420 = vmatprep.subr.mxu0 0.0
    %421 = vmatpush1.msra.mxu0 %v316
    %422 = vmatprep.subr.mxu0 0.0
    %423 = vmatpush1.msra.mxu0 %v319
    %424 = vmatprep.subr.mxu0 0.0
    %425 = vmatpush1.msra.mxu0 %v322
    %426 = vmatprep.subr.mxu0 0.0
    %427 = vmatpush1.msra.mxu0 0.0
    %428 = vmatprep.subr.mxu0 0.0
    %429 = vmatpush1.msra.mxu0 0.0
    %430 = vmatprep.subr.mxu0 0.0
    %431 = vmatpush1.msra.mxu0 0.0
    %432 = vmatprep.subr.mxu0 0.0
    %433 = vmatpush1.msra.mxu0 0.0
    %434 = vmatprep.subr.mxu0 0.0
    %435 = vmatpush1.msra.mxu0 0.0
    %436 = vmatprep.subr.mxu0 0.0
    %437 = vmatpush1.msra.mxu0 0.0
    %438 = vmatprep.subr.mxu0 0.0
    %439 = vmatpush1.msra.mxu0 0.0
    %440 = vmatprep.subr.mxu0 0.0
    %441 = vmatpush1.msra.mxu0 0.0
    %442 = vmatprep.subr.mxu0 0.0
    %443 = vmatpush1.msra.mxu0 0.0
    %444 = vmatprep.subr.mxu0 0.0
    %445 = vmatpush1.msra.mxu0 0.0
    %446 = vmatprep.subr.mxu0 0.0
    %447 = vmatpush1.msra.mxu0 0.0
    %448 = vmatprep.subr.mxu0 0.0
    %449 = vmatpush1.msra.mxu0 0.0
    %450 = vmatprep.subr.mxu0 0.0
    %451 = vmatpush1.msra.mxu0 0.0
    %452 = vmatprep.subr.mxu0 0.0
    %453 = vmatpush1.msra.mxu0 0.0
    %454 = vmatprep.subr.mxu0 0.0
    %455 = vmatpush1.msra.mxu0 0.0
    %456 = vmatprep.subr.mxu0 0.0
    %457 = vmatpush1.msra.mxu0 0.0
    %458 = vmatprep.mubr.f32.mxu0 0.0
    %459 = vmatmul.mubr.f32.gmra.mrb[0].mxu0 %v269
    %v460 = vpop.f32.mrb[0].mxu0
    %v461 = vadd.f32 0.0, %v460
    %v462 = vpop.f32.mrb[0].mxu0
    %463 = vdwg.mxu0
    %v464 = vadd.f32 %v272, %v390
    %v465 = vadd.f32 %v273, %v392
    %v466 = vxor.u32 %v464, 2147483648
    %v467 = vxor.u32 %v465, 2147483648
    %v468 = vmul.f32 %v466, 1.442695
    %v469 = vpow.pop %v468
    %v470 = vmul.f32 %v467, 1.442695
    %v471 = vpow.pop %v470
    %v472 = vadd.f32 %v469, 1.0
    %v473 = vadd.f32 %v471, 1.0
    %v474 = vrcp.pop %v472
    %v475 = vmul.f32 1.0, %v474
    %v476 = vrcp.pop %v473
    %v477 = vmul.f32 1.0, %v476
    %v478 = vadd.f32 %v461, %v53
    %v479 = vmul.f32 %v475, %v478
    %v480 = vadd.f32 %v274, %v479
    %v481 = vtanh.pop %v480
    %v482 = vsub.f32 1.0, %v477
    %v483 = vmul.f32 %v482, %v481
    %v484 = vmul.f32 %v477, %v269
    %v485 = vadd.f32 %v483, %v484
    %s486 = scalar_lea.vmem [#allocation8], 8
    %487 = vst [vmem:[%s486] sm:$0xff] %v485
    %s488 = scalar_lea.vmem [#allocation3], 48
    %v489 = vld [vmem:[%s488] sm:$0xff]
    %v490 = vld [vmem:[%s488 + $0x8] sm:$0xff]
    %v491 = vld [vmem:[%s488 + $0x10] sm:$0xff]
    %v492 = vld [vmem:[#allocation6] sm:$0xff]
    %v493 = vld [vmem:[#allocation6 + $0x8] sm:$0xff]
    %v494 = vld [vmem:[#allocation6 + $0x10] sm:$0xff]
    %v495 = vld [vmem:[#allocation6 + $0x18] sm:$0xff]
    %v496 = vld [vmem:[#allocation6 + $0x20] sm:$0xff]
    %v497 = vld [vmem:[#allocation6 + $0x28] sm:$0xff]
    %v498 = vld [vmem:[#allocation6 + $0x30] sm:$0xff]
    %v499 = vld [vmem:[#allocation6 + $0x38] sm:$0xff]
    %v500 = vld [vmem:[#allocation6 + $0x40] sm:$0xff]
    %v501 = vld [vmem:[#allocation6 + $0x48] sm:$0xff]
    %v502 = vld [vmem:[#allocation6 + $0x50] sm:$0xff]
    %v503 = vld [vmem:[#allocation6 + $0x58] sm:$0xff]
    %v504 = vld [vmem:[#allocation6 + $0x60] sm:$0xff]
    %v505 = vld [vmem:[#allocation6 + $0x68] sm:$0xff]
    %v506 = vld [vmem:[#allocation6 + $0x70] sm:$0xff]
    %v507 = vld [vmem:[#allocation6 + $0x78] sm:$0xff]
    %v508 = vld [vmem:[#allocation6 + $0x80] sm:$0xff]
    %v509 = vld [vmem:[#allocation6 + $0x88] sm:$0xff]
    %v510 = vld [vmem:[#allocation6 + $0x90] sm:$0xff]
    %v511 = vld [vmem:[#allocation6 + $0x98] sm:$0xff]
    %v512 = vld [vmem:[#allocation6 + $0xa0] sm:$0xff]
    %v513 = vld [vmem:[#allocation6 + $0xa8] sm:$0xff]
    %v514 = vld [vmem:[#allocation6 + $0xb0] sm:$0xff]
    %v515 = vld [vmem:[#allocation6 + $0xb8] sm:$0xff]
    %v516 = vld [vmem:[#allocation6 + $0xc0] sm:$0xff]
    %v517 = vld [vmem:[#allocation6 + $0xc8] sm:$0xff]
    %v518 = vld [vmem:[#allocation6 + $0xd0] sm:$0xff]
    %v519 = vld [vmem:[#allocation6 + $0xd8] sm:$0xff]
    %v520 = vld [vmem:[#allocation6 + $0xe0] sm:$0xff]
    %v521 = vld [vmem:[#allocation6 + $0xe8] sm:$0xff]
    %v522 = vld [vmem:[#allocation6 + $0xf0] sm:$0xff]
    %v523 = vld [vmem:[#allocation6 + $0xf8] sm:$0xff]
    %v524 = vld [vmem:[#allocation6 + $0x100] sm:$0xff]
    %v525 = vld [vmem:[#allocation6 + $0x108] sm:$0xff]
    %v526 = vld [vmem:[#allocation6 + $0x110] sm:$0xff]
    %v527 = vld [vmem:[#allocation6 + $0x118] sm:$0xff]
    %v528 = vld [vmem:[#allocation6 + $0x120] sm:$0xff]
    %v529 = vld [vmem:[#allocation6 + $0x128] sm:$0xff]
    %v530 = vld [vmem:[#allocation6 + $0x130] sm:$0xff]
    %v531 = vld [vmem:[#allocation6 + $0x138] sm:$0xff]
    %v532 = vld [vmem:[#allocation6 + $0x140] sm:$0xff]
    %v533 = vld [vmem:[#allocation6 + $0x148] sm:$0xff]
    %v534 = vld [vmem:[#allocation6 + $0x150] sm:$0xff]
    %v535 = vld [vmem:[#allocation6 + $0x158] sm:$0xff]
    %v536 = vld [vmem:[#allocation6 + $0x160] sm:$0xff]
    %v537 = vld [vmem:[#allocation6 + $0x168] sm:$0xff]
    %v538 = vld [vmem:[#allocation6 + $0x170] sm:$0xff]
    %v539 = vld [vmem:[#allocation6 + $0x178] sm:$0xff]
    %540 = vmatprep.subr.mxu0 %v493
    %541 = vmatpush1.msra.mxu0 %v492
    %542 = vmatprep.subr.mxu0 %v496
    %543 = vmatpush1.msra.mxu0 %v495
    %544 = vmatprep.subr.mxu0 %v499
    %545 = vmatpush1.msra.mxu0 %v498
    %546 = vmatprep.subr.mxu0 %v502
    %547 = vmatpush1.msra.mxu0 %v501
    %548 = vmatprep.subr.mxu0 %v505
    %549 = vmatpush1.msra.mxu0 %v504
    %550 = vmatprep.subr.mxu0 %v508
    %551 = vmatpush1.msra.mxu0 %v507
    %552 = vmatprep.subr.mxu0 %v511
    %553 = vmatpush1.msra.mxu0 %v510
    %554 = vmatprep.subr.mxu0 %v514
    %555 = vmatpush1.msra.mxu0 %v513
    %556 = vmatprep.subr.mxu0 %v517
    %557 = vmatpush1.msra.mxu0 %v516
    %558 = vmatprep.subr.mxu0 %v520
    %559 = vmatpush1.msra.mxu0 %v519
    %560 = vmatprep.subr.mxu0 %v523
    %561 = vmatpush1.msra.mxu0 %v522
    %562 = vmatprep.subr.mxu0 %v526
    %563 = vmatpush1.msra.mxu0 %v525
    %564 = vmatprep.subr.mxu0 %v529
    %565 = vmatpush1.msra.mxu0 %v528
    %566 = vmatprep.subr.mxu0 %v532
    %567 = vmatpush1.msra.mxu0 %v531
    %568 = vmatprep.subr.mxu0 %v535
    %569 = vmatpush1.msra.mxu0 %v534
    %570 = vmatprep.subr.mxu0 %v538
    %571 = vmatpush1.msra.mxu0 %v537
    %572 = vmatprep.subr.mxu0 0.0
    %573 = vmatpush1.msra.mxu0 0.0
    %574 = vmatprep.subr.mxu0 0.0
    %575 = vmatpush1.msra.mxu0 0.0
    %576 = vmatprep.subr.mxu0 0.0
    %577 = vmatpush1.msra.mxu0 0.0
    %578 = vmatprep.subr.mxu0 0.0
    %579 = vmatpush1.msra.mxu0 0.0
    %580 = vmatprep.subr.mxu0 0.0
    %581 = vmatpush1.msra.mxu0 0.0
    %582 = vmatprep.subr.mxu0 0.0
    %583 = vmatpush1.msra.mxu0 0.0
    %584 = vmatprep.subr.mxu0 0.0
    %585 = vmatpush1.msra.mxu0 0.0
    %586 = vmatprep.subr.mxu0 0.0
    %587 = vmatpush1.msra.mxu0 0.0
    %588 = vmatprep.subr.mxu0 0.0
    %589 = vmatpush1.msra.mxu0 0.0
    %590 = vmatprep.subr.mxu0 0.0
    %591 = vmatpush1.msra.mxu0 0.0
    %592 = vmatprep.subr.mxu0 0.0
    %593 = vmatpush1.msra.mxu0 0.0
    %594 = vmatprep.subr.mxu0 0.0
    %595 = vmatpush1.msra.mxu0 0.0
    %596 = vmatprep.subr.mxu0 0.0
    %597 = vmatpush1.msra.mxu0 0.0
    %598 = vmatprep.subr.mxu0 0.0
    %599 = vmatpush1.msra.mxu0 0.0
    %600 = vmatprep.subr.mxu0 0.0
    %601 = vmatpush1.msra.mxu0 0.0
    %602 = vmatprep.subr.mxu0 0.0
    %603 = vmatpush1.msra.mxu0 0.0
    %604 = vmatprep.mubr.f32.mxu0 0.0
    %605 = vmatmul.mubr.f32.gmra.mrb[0].mxu0 %v485
    %v606 = vpop.f32.mrb[0].mxu0
    %v607 = vadd.f32 0.0, %v606
    %v608 = vpop.f32.mrb[0].mxu0
    %v609 = vadd.f32 0.0, %v608
    %610 = vdwg.mxu0
    %611 = vmatprep.subr.mxu0 0.0
    %612 = vmatpush1.msra.mxu0 %v494
    %613 = vmatprep.subr.mxu0 0.0
    %614 = vmatpush1.msra.mxu0 %v497
    %615 = vmatprep.subr.mxu0 0.0
    %616 = vmatpush1.msra.mxu0 %v500
    %617 = vmatprep.subr.mxu0 0.0
    %618 = vmatpush1.msra.mxu0 %v503
    %619 = vmatprep.subr.mxu0 0.0
    %620 = vmatpush1.msra.mxu0 %v506
    %621 = vmatprep.subr.mxu0 0.0
    %622 = vmatpush1.msra.mxu0 %v509
    %623 = vmatprep.subr.mxu0 0.0
    %624 = vmatpush1.msra.mxu0 %v512
    %625 = vmatprep.subr.mxu0 0.0
    %626 = vmatpush1.msra.mxu0 %v515
    %627 = vmatprep.subr.mxu0 0.0
    %628 = vmatpush1.msra.mxu0 %v518
    %629 = vmatprep.subr.mxu0 0.0
    %630 = vmatpush1.msra.mxu0 %v521
    %631 = vmatprep.subr.mxu0 0.0
    %632 = vmatpush1.msra.mxu0 %v524
    %633 = vmatprep.subr.mxu0 0.0
    %634 = vmatpush1.msra.mxu0 %v527
    %635 = vmatprep.subr.mxu0 0.0
    %636 = vmatpush1.msra.mxu0 %v530
    %637 = vmatprep.subr.mxu0 0.0
    %638 = vmatpush1.msra.mxu0 %v533
    %639 = vmatprep.subr.mxu0 0.0
    %640 = vmatpush1.msra.mxu0 %v536
    %641 = vmatprep.subr.mxu0 0.0
    %642 = vmatpush1.msra.mxu0 %v539
    %643 = vmatprep.subr.mxu0 0.0
    %644 = vmatpush1.msra.mxu0 0.0
    %645 = vmatprep.subr.mxu0 0.0
    %646 = vmatpush1.msra.mxu0 0.0
    %647 = vmatprep.subr.mxu0 0.0
    %648 = vmatpush1.msra.mxu0 0.0
    %649 = vmatprep.subr.mxu0 0.0
    %650 = vmatpush1.msra.mxu0 0.0
    %651 = vmatprep.subr.mxu0 0.0
    %652 = vmatpush1.msra.mxu0 0.0
    %653 = vmatprep.subr.mxu0 0.0
    %654 = vmatpush1.msra.mxu0 0.0
    %655 = vmatprep.subr.mxu0 0.0
    %656 = vmatpush1.msra.mxu0 0.0
    %657 = vmatprep.subr.mxu0 0.0
    %658 = vmatpush1.msra.mxu0 0.0
    %659 = vmatprep.subr.mxu0 0.0
    %660 = vmatpush1.msra.mxu0 0.0
    %661 = vmatprep.subr.mxu0 0.0
    %662 = vmatpush1.msra.mxu0 0.0
    %663 = vmatprep.subr.mxu0 0.0
    %664 = vmatpush1.msra.mxu0 0.0
    %665 = vmatprep.subr.mxu0 0.0
    %666 = vmatpush1.msra.mxu0 0.0
    %667 = vmatprep.subr.mxu0 0.0
    %668 = vmatpush1.msra.mxu0 0.0
    %669 = vmatprep.subr.mxu0 0.0
    %670 = vmatpush1.msra.mxu0 0.0
    %671 = vmatprep.subr.mxu0 0.0
    %672 = vmatpush1.msra.mxu0 0.0
    %673 = vmatprep.subr.mxu0 0.0
    %674 = vmatpush1.msra.mxu0 0.0
    %675 = vmatprep.mubr.f32.mxu0 0.0
    %676 = vmatmul.mubr.f32.gmra.mrb[0].mxu0 %v485
    %v677 = vpop.f32.mrb[0].mxu0
    %v678 = vadd.f32 0.0, %v677
    %v679 = vpop.f32.mrb[0].mxu0
    %680 = vdwg.mxu0
    %v681 = vadd.f32 %v489, %v607
    %v682 = vadd.f32 %v490, %v609
    %v683 = vxor.u32 %v681, 2147483648
    %v684 = vxor.u32 %v682, 2147483648
    %v685 = vmul.f32 %v683, 1.442695
    %v686 = vpow.pop %v685
    %v687 = vmul.f32 %v684, 1.442695
    %v688 = vpow.pop %v687
    %v689 = vadd.f32 %v686, 1.0
    %v690 = vadd.f32 %v688, 1.0
    %v691 = vrcp.pop %v689
    %v692 = vmul.f32 1.0, %v691
    %v693 = vrcp.pop %v690
    %v694 = vmul.f32 1.0, %v693
    %v695 = vadd.f32 %v678, %v53
    %v696 = vmul.f32 %v692, %v695
    %v697 = vadd.f32 %v491, %v696
    %v698 = vtanh.pop %v697
    %v699 = vsub.f32 1.0, %v694
    %v700 = vmul.f32 %v699, %v698
    %v701 = vmul.f32 %v694, %v485
    %v702 = vadd.f32 %v700, %v701
    %s703 = scalar_lea.vmem [#allocation8], 16
    %704 = vst [vmem:[%s703] sm:$0xff] %v702
    %s705 = scalar_lea.vmem [#allocation3], 72
    %v706 = vld [vmem:[%s705] sm:$0xff]
    %v707 = vld [vmem:[%s705 + $0x8] sm:$0xff]
    %v708 = vld [vmem:[%s705 + $0x10] sm:$0xff]
    %v709 = vld [vmem:[#allocation6] sm:$0xff]
    %v710 = vld [vmem:[#allocation6 + $0x8] sm:$0xff]
    %v711 = vld [vmem:[#allocation6 + $0x10] sm:$0xff]
    %v712 = vld [vmem:[#allocation6 + $0x18] sm:$0xff]
    %v713 = vld [vmem:[#allocation6 + $0x20] sm:$0xff]
    %v714 = vld [vmem:[#allocation6 + $0x28] sm:$0xff]
    %v715 = vld [vmem:[#allocation6 + $0x30] sm:$0xff]
    %v716 = vld [vmem:[#allocation6 + $0x38] sm:$0xff]
    %v717 = vld [vmem:[#allocation6 + $0x40] sm:$0xff]
    %v718 = vld [vmem:[#allocation6 + $0x48] sm:$0xff]
    %v719 = vld [vmem:[#allocation6 + $0x50] sm:$0xff]
    %v720 = vld [vmem:[#allocation6 + $0x58] sm:$0xff]
    %v721 = vld [vmem:[#allocation6 + $0x60] sm:$0xff]
    %v722 = vld [vmem:[#allocation6 + $0x68] sm:$0xff]
    %v723 = vld [vmem:[#allocation6 + $0x70] sm:$0xff]
    %v724 = vld [vmem:[#allocation6 + $0x78] sm:$0xff]
    %v725 = vld [vmem:[#allocation6 + $0x80] sm:$0xff]
    %v726 = vld [vmem:[#allocation6 + $0x88] sm:$0xff]
    %v727 = vld [vmem:[#allocation6 + $0x90] sm:$0xff]
    %v728 = vld [vmem:[#allocation6 + $0x98] sm:$0xff]
    %v729 = vld [vmem:[#allocation6 + $0xa0] sm:$0xff]
    %v730 = vld [vmem:[#allocation6 + $0xa8] sm:$0xff]
    %v731 = vld [vmem:[#allocation6 + $0xb0] sm:$0xff]
    %v732 = vld [vmem:[#allocation6 + $0xb8] sm:$0xff]
    %v733 = vld [vmem:[#allocation6 + $0xc0] sm:$0xff]
    %v734 = vld [vmem:[#allocation6 + $0xc8] sm:$0xff]
    %v735 = vld [vmem:[#allocation6 + $0xd0] sm:$0xff]
    %v736 = vld [vmem:[#allocation6 + $0xd8] sm:$0xff]
    %v737 = vld [vmem:[#allocation6 + $0xe0] sm:$0xff]
    %v738 = vld [vmem:[#allocation6 + $0xe8] sm:$0xff]
    %v739 = vld [vmem:[#allocation6 + $0xf0] sm:$0xff]
    %v740 = vld [vmem:[#allocation6 + $0xf8] sm:$0xff]
    %v741 = vld [vmem:[#allocation6 + $0x100] sm:$0xff]
    %v742 = vld [vmem:[#allocation6 + $0x108] sm:$0xff]
    %v743 = vld [vmem:[#allocation6 + $0x110] sm:$0xff]
    %v744 = vld [vmem:[#allocation6 + $0x118] sm:$0xff]
    %v745 = vld [vmem:[#allocation6 + $0x120] sm:$0xff]
    %v746 = vld [vmem:[#allocation6 + $0x128] sm:$0xff]
    %v747 = vld [vmem:[#allocation6 + $0x130] sm:$0xff]
    %v748 = vld [vmem:[#allocation6 + $0x138] sm:$0xff]
    %v749 = vld [vmem:[#allocation6 + $0x140] sm:$0xff]
    %v750 = vld [vmem:[#allocation6 + $0x148] sm:$0xff]
    %v751 = vld [vmem:[#allocation6 + $0x150] sm:$0xff]
    %v752 = vld [vmem:[#allocation6 + $0x158] sm:$0xff]
    %v753 = vld [vmem:[#allocation6 + $0x160] sm:$0xff]
    %v754 = vld [vmem:[#allocation6 + $0x168] sm:$0xff]
    %v755 = vld [vmem:[#allocation6 + $0x170] sm:$0xff]
    %v756 = vld [vmem:[#allocation6 + $0x178] sm:$0xff]
    %757 = vmatprep.subr.mxu0 %v710
    %758 = vmatpush1.msra.mxu0 %v709
    %759 = vmatprep.subr.mxu0 %v713
    %760 = vmatpush1.msra.mxu0 %v712
    %761 = vmatprep.subr.mxu0 %v716
    %762 = vmatpush1.msra.mxu0 %v715
    %763 = vmatprep.subr.mxu0 %v719
    %764 = vmatpush1.msra.mxu0 %v718
    %765 = vmatprep.subr.mxu0 %v722
    %766 = vmatpush1.msra.mxu0 %v721
    %767 = vmatprep.subr.mxu0 %v725
    %768 = vmatpush1.msra.mxu0 %v724
    %769 = vmatprep.subr.mxu0 %v728
    %770 = vmatpush1.msra.mxu0 %v727
    %771 = vmatprep.subr.mxu0 %v731
    %772 = vmatpush1.msra.mxu0 %v730
    %773 = vmatprep.subr.mxu0 %v734
    %774 = vmatpush1.msra.mxu0 %v733
    %775 = vmatprep.subr.mxu0 %v737
    %776 = vmatpush1.msra.mxu0 %v736
    %777 = vmatprep.subr.mxu0 %v740
    %778 = vmatpush1.msra.mxu0 %v739
    %779 = vmatprep.subr.mxu0 %v743
    %780 = vmatpush1.msra.mxu0 %v742
    %781 = vmatprep.subr.mxu0 %v746
    %782 = vmatpush1.msra.mxu0 %v745
    %783 = vmatprep.subr.mxu0 %v749
    %784 = vmatpush1.msra.mxu0 %v748
    %785 = vmatprep.subr.mxu0 %v752
    %786 = vmatpush1.msra.mxu0 %v751
    %787 = vmatprep.subr.mxu0 %v755
    %788 = vmatpush1.msra.mxu0 %v754
    %789 = vmatprep.subr.mxu0 0.0
    %790 = vmatpush1.msra.mxu0 0.0
    %791 = vmatprep.subr.mxu0 0.0
    %792 = vmatpush1.msra.mxu0 0.0
    %793 = vmatprep.subr.mxu0 0.0
    %794 = vmatpush1.msra.mxu0 0.0
    %795 = vmatprep.subr.mxu0 0.0
    %796 = vmatpush1.msra.mxu0 0.0
    %797 = vmatprep.subr.mxu0 0.0
    %798 = vmatpush1.msra.mxu0 0.0
    %799 = vmatprep.subr.mxu0 0.0
    %800 = vmatpush1.msra.mxu0 0.0
    %801 = vmatprep.subr.mxu0 0.0
    %802 = vmatpush1.msra.mxu0 0.0
    %803 = vmatprep.subr.mxu0 0.0
    %804 = vmatpush1.msra.mxu0 0.0
    %805 = vmatprep.subr.mxu0 0.0
    %806 = vmatpush1.msra.mxu0 0.0
    %807 = vmatprep.subr.mxu0 0.0
    %808 = vmatpush1.msra.mxu0 0.0
    %809 = vmatprep.subr.mxu0 0.0
    %810 = vmatpush1.msra.mxu0 0.0
    %811 = vmatprep.subr.mxu0 0.0
    %812 = vmatpush1.msra.mxu0 0.0
    %813 = vmatprep.subr.mxu0 0.0
    %814 = vmatpush1.msra.mxu0 0.0
    %815 = vmatprep.subr.mxu0 0.0
    %816 = vmatpush1.msra.mxu0 0.0
    %817 = vmatprep.subr.mxu0 0.0
    %818 = vmatpush1.msra.mxu0 0.0
    %819 = vmatprep.subr.mxu0 0.0
    %820 = vmatpush1.msra.mxu0 0.0
    %821 = vmatprep.mubr.f32.mxu0 0.0
    %822 = vmatmul.mubr.f32.gmra.mrb[0].mxu0 %v702
    %v823 = vpop.f32.mrb[0].mxu0
    %v824 = vadd.f32 0.0, %v823
    %v825 = vpop.f32.mrb[0].mxu0
    %v826 = vadd.f32 0.0, %v825
    %827 = vdwg.mxu0
    %828 = vmatprep.subr.mxu0 0.0
    %829 = vmatpush1.msra.mxu0 %v711
    %830 = vmatprep.subr.mxu0 0.0
    %831 = vmatpush1.msra.mxu0 %v714
    %832 = vmatprep.subr.mxu0 0.0
    %833 = vmatpush1.msra.mxu0 %v717
    %834 = vmatprep.subr.mxu0 0.0
    %835 = vmatpush1.msra.mxu0 %v720
    %836 = vmatprep.subr.mxu0 0.0
    %837 = vmatpush1.msra.mxu0 %v723
    %838 = vmatprep.subr.mxu0 0.0
    %839 = vmatpush1.msra.mxu0 %v726
    %840 = vmatprep.subr.mxu0 0.0
    %841 = vmatpush1.msra.mxu0 %v729
    %842 = vmatprep.subr.mxu0 0.0
    %843 = vmatpush1.msra.mxu0 %v732
    %844 = vmatprep.subr.mxu0 0.0
    %845 = vmatpush1.msra.mxu0 %v735
    %846 = vmatprep.subr.mxu0 0.0
    %847 = vmatpush1.msra.mxu0 %v738
    %848 = vmatprep.subr.mxu0 0.0
    %849 = vmatpush1.msra.mxu0 %v741
    %850 = vmatprep.subr.mxu0 0.0
    %851 = vmatpush1.msra.mxu0 %v744
    %852 = vmatprep.subr.mxu0 0.0
    %853 = vmatpush1.msra.mxu0 %v747
    %854 = vmatprep.subr.mxu0 0.0
    %855 = vmatpush1.msra.mxu0 %v750
    %856 = vmatprep.subr.mxu0 0.0
    %857 = vmatpush1.msra.mxu0 %v753
    %858 = vmatprep.subr.mxu0 0.0
    %859 = vmatpush1.msra.mxu0 %v756
    %860 = vmatprep.subr.mxu0 0.0
    %861 = vmatpush1.msra.mxu0 0.0
    %862 = vmatprep.subr.mxu0 0.0
    %863 = vmatpush1.msra.mxu0 0.0
    %864 = vmatprep.subr.mxu0 0.0
    %865 = vmatpush1.msra.mxu0 0.0
    %866 = vmatprep.subr.mxu0 0.0
    %867 = vmatpush1.msra.mxu0 0.0
    %868 = vmatprep.subr.mxu0 0.0
    %869 = vmatpush1.msra.mxu0 0.0
    %870 = vmatprep.subr.mxu0 0.0
    %871 = vmatpush1.msra.mxu0 0.0
    %872 = vmatprep.subr.mxu0 0.0
    %873 = vmatpush1.msra.mxu0 0.0
    %874 = vmatprep.subr.mxu0 0.0
    %875 = vmatpush1.msra.mxu0 0.0
    %876 = vmatprep.subr.mxu0 0.0
    %877 = vmatpush1.msra.mxu0 0.0
    %878 = vmatprep.subr.mxu0 0.0
    %879 = vmatpush1.msra.mxu0 0.0
    %880 = vmatprep.subr.mxu0 0.0
    %881 = vmatpush1.msra.mxu0 0.0
    %882 = vmatprep.subr.mxu0 0.0
    %883 = vmatpush1.msra.mxu0 0.0
    %884 = vmatprep.subr.mxu0 0.0
    %885 = vmatpush1.msra.mxu0 0.0
    %886 = vmatprep.subr.mxu0 0.0
    %887 = vmatpush1.msra.mxu0 0.0
    %888 = vmatprep.subr.mxu0 0.0
    %889 = vmatpush1.msra.mxu0 0.0
    %890 = vmatprep.subr.mxu0 0.0
    %891 = vmatpush1.msra.mxu0 0.0
    %892 = vmatprep.mubr.f32.mxu0 0.0
    %893 = vmatmul.mubr.f32.gmra.mrb[0].mxu0 %v702
    %v894 = vpop.f32.mrb[0].mxu0
    %v895 = vadd.f32 0.0, %v894
    %v896 = vpop.f32.mrb[0].mxu0
    %897 = vdwg.mxu0
    %v898 = vadd.f32 %v706, %v824
    %v899 = vadd.f32 %v707, %v826
    %v900 = vxor.u32 %v898, 2147483648
    %v901 = vxor.u32 %v899, 2147483648
    %v902 = vmul.f32 %v900, 1.442695
    %v903 = vpow.pop %v902
    %v904 = vmul.f32 %v901, 1.442695
    %v905 = vpow.pop %v904
    %v906 = vadd.f32 %v903, 1.0
    %v907 = vadd.f32 %v905, 1.0
    %v908 = vrcp.pop %v906
    %v909 = vmul.f32 1.0, %v908
    %v910 = vrcp.pop %v907
    %v911 = vmul.f32 1.0, %v910
    %v912 = vadd.f32 %v895, %v53
    %v913 = vmul.f32 %v909, %v912
    %v914 = vadd.f32 %v708, %v913
    %v915 = vtanh.pop %v914
    %v916 = vsub.f32 1.0, %v911
    %v917 = vmul.f32 %v916, %v915
    %v918 = vmul.f32 %v911, %v702
    %v919 = vadd.f32 %v917, %v918
    %s920 = scalar_lea.vmem [#allocation8], 24
    %921 = vst [vmem:[%s920] sm:$0xff] %v919
    %s922 = scalar_lea.vmem [#allocation3], 96
    %v923 = vld [vmem:[%s922] sm:$0xff]
    %v924 = vld [vmem:[%s922 + $0x8] sm:$0xff]
    %v925 = vld [vmem:[%s922 + $0x10] sm:$0xff]
    %v926 = vld [vmem:[#allocation6] sm:$0xff]
    %v927 = vld [vmem:[#allocation6 + $0x8] sm:$0xff]
    %v928 = vld [vmem:[#allocation6 + $0x10] sm:$0xff]
    %v929 = vld [vmem:[#allocation6 + $0x18] sm:$0xff]
    %v930 = vld [vmem:[#allocation6 + $0x20] sm:$0xff]
    %v931 = vld [vmem:[#allocation6 + $0x28] sm:$0xff]
    %v932 = vld [vmem:[#allocation6 + $0x30] sm:$0xff]
    %v933 = vld [vmem:[#allocation6 + $0x38] sm:$0xff]
    %v934 = vld [vmem:[#allocation6 + $0x40] sm:$0xff]
    %v935 = vld [vmem:[#allocation6 + $0x48] sm:$0xff]
    %v936 = vld [vmem:[#allocation6 + $0x50] sm:$0xff]
    %v937 = vld [vmem:[#allocation6 + $0x58] sm:$0xff]
    %v938 = vld [vmem:[#allocation6 + $0x60] sm:$0xff]
    %v939 = vld [vmem:[#allocation6 + $0x68] sm:$0xff]
    %v940 = vld [vmem:[#allocation6 + $0x70] sm:$0xff]
    %v941 = vld [vmem:[#allocation6 + $0x78] sm:$0xff]
    %v942 = vld [vmem:[#allocation6 + $0x80] sm:$0xff]
    %v943 = vld [vmem:[#allocation6 + $0x88] sm:$0xff]
    %v944 = vld [vmem:[#allocation6 + $0x90] sm:$0xff]
    %v945 = vld [vmem:[#allocation6 + $0x98] sm:$0xff]
    %v946 = vld [vmem:[#allocation6 + $0xa0] sm:$0xff]
    %v947 = vld [vmem:[#allocation6 + $0xa8] sm:$0xff]
    %v948 = vld [vmem:[#allocation6 + $0xb0] sm:$0xff]
    %v949 = vld [vmem:[#allocation6 + $0xb8] sm:$0xff]
    %v950 = vld [vmem:[#allocation6 + $0xc0] sm:$0xff]
    %v951 = vld [vmem:[#allocation6 + $0xc8] sm:$0xff]
    %v952 = vld [vmem:[#allocation6 + $0xd0] sm:$0xff]
    %v953 = vld [vmem:[#allocation6 + $0xd8] sm:$0xff]
    %v954 = vld [vmem:[#allocation6 + $0xe0] sm:$0xff]
    %v955 = vld [vmem:[#allocation6 + $0xe8] sm:$0xff]
    %v956 = vld [vmem:[#allocation6 + $0xf0] sm:$0xff]
    %v957 = vld [vmem:[#allocation6 + $0xf8] sm:$0xff]
    %v958 = vld [vmem:[#allocation6 + $0x100] sm:$0xff]
    %v959 = vld [vmem:[#allocation6 + $0x108] sm:$0xff]
    %v960 = vld [vmem:[#allocation6 + $0x110] sm:$0xff]
    %v961 = vld [vmem:[#allocation6 + $0x118] sm:$0xff]
    %v962 = vld [vmem:[#allocation6 + $0x120] sm:$0xff]
    %v963 = vld [vmem:[#allocation6 + $0x128] sm:$0xff]
    %v964 = vld [vmem:[#allocation6 + $0x130] sm:$0xff]
    %v965 = vld [vmem:[#allocation6 + $0x138] sm:$0xff]
    %v966 = vld [vmem:[#allocation6 + $0x140] sm:$0xff]
    %v967 = vld [vmem:[#allocation6 + $0x148] sm:$0xff]
    %v968 = vld [vmem:[#allocation6 + $0x150] sm:$0xff]
    %v969 = vld [vmem:[#allocation6 + $0x158] sm:$0xff]
    %v970 = vld [vmem:[#allocation6 + $0x160] sm:$0xff]
    %v971 = vld [vmem:[#allocation6 + $0x168] sm:$0xff]
    %v972 = vld [vmem:[#allocation6 + $0x170] sm:$0xff]
    %v973 = vld [vmem:[#allocation6 + $0x178] sm:$0xff]
    %974 = vmatprep.subr.mxu0 %v927
    %975 = vmatpush1.msra.mxu0 %v926
    %976 = vmatprep.subr.mxu0 %v930
    %977 = vmatpush1.msra.mxu0 %v929
    %978 = vmatprep.subr.mxu0 %v933
    %979 = vmatpush1.msra.mxu0 %v932
    %980 = vmatprep.subr.mxu0 %v936
    %981 = vmatpush1.msra.mxu0 %v935
    %982 = vmatprep.subr.mxu0 %v939
    %983 = vmatpush1.msra.mxu0 %v938
    %984 = vmatprep.subr.mxu0 %v942
    %985 = vmatpush1.msra.mxu0 %v941
    %986 = vmatprep.subr.mxu0 %v945
    %987 = vmatpush1.msra.mxu0 %v944
    %988 = vmatprep.subr.mxu0 %v948
    %989 = vmatpush1.msra.mxu0 %v947
    %990 = vmatprep.subr.mxu0 %v951
    %991 = vmatpush1.msra.mxu0 %v950
    %992 = vmatprep.subr.mxu0 %v954
    %993 = vmatpush1.msra.mxu0 %v953
    %994 = vmatprep.subr.mxu0 %v957
    %995 = vmatpush1.msra.mxu0 %v956
    %996 = vmatprep.subr.mxu0 %v960
    %997 = vmatpush1.msra.mxu0 %v959
    %998 = vmatprep.subr.mxu0 %v963
    %999 = vmatpush1.msra.mxu0 %v962
    %1000 = vmatprep.subr.mxu0 %v966
    %1001 = vmatpush1.msra.mxu0 %v965
    %1002 = vmatprep.subr.mxu0 %v969
    %1003 = vmatpush1.msra.mxu0 %v968
    %1004 = vmatprep.subr.mxu0 %v972
    %1005 = vmatpush1.msra.mxu0 %v971
    %1006 = vmatprep.subr.mxu0 0.0
    %1007 = vmatpush1.msra.mxu0 0.0
    %1008 = vmatprep.subr.mxu0 0.0
    %1009 = vmatpush1.msra.mxu0 0.0
    %1010 = vmatprep.subr.mxu0 0.0
    %1011 = vmatpush1.msra.mxu0 0.0
    %1012 = vmatprep.subr.mxu0 0.0
    %1013 = vmatpush1.msra.mxu0 0.0
    %1014 = vmatprep.subr.mxu0 0.0
    %1015 = vmatpush1.msra.mxu0 0.0
    %1016 = vmatprep.subr.mxu0 0.0
    %1017 = vmatpush1.msra.mxu0 0.0
    %1018 = vmatprep.subr.mxu0 0.0
    %1019 = vmatpush1.msra.mxu0 0.0
    %1020 = vmatprep.subr.mxu0 0.0
    %1021 = vmatpush1.msra.mxu0 0.0
    %1022 = vmatprep.subr.mxu0 0.0
    %1023 = vmatpush1.msra.mxu0 0.0
    %1024 = vmatprep.subr.mxu0 0.0
    %1025 = vmatpush1.msra.mxu0 0.0
    %1026 = vmatprep.subr.mxu0 0.0
    %1027 = vmatpush1.msra.mxu0 0.0
    %1028 = vmatprep.subr.mxu0 0.0
    %1029 = vmatpush1.msra.mxu0 0.0
    %1030 = vmatprep.subr.mxu0 0.0
    %1031 = vmatpush1.msra.mxu0 0.0
    %1032 = vmatprep.subr.mxu0 0.0
    %1033 = vmatpush1.msra.mxu0 0.0
    %1034 = vmatprep.subr.mxu0 0.0
    %1035 = vmatpush1.msra.mxu0 0.0
    %1036 = vmatprep.subr.mxu0 0.0
    %1037 = vmatpush1.msra.mxu0 0.0
    %1038 = vmatprep.mubr.f32.mxu0 0.0
    %1039 = vmatmul.mubr.f32.gmra.mrb[0].mxu0 %v919
    %v1040 = vpop.f32.mrb[0].mxu0
    %v1041 = vadd.f32 0.0, %v1040
    %v1042 = vpop.f32.mrb[0].mxu0
    %v1043 = vadd.f32 0.0, %v1042
    %1044 = vdwg.mxu0
    %1045 = vmatprep.subr.mxu0 0.0
    %1046 = vmatpush1.msra.mxu0 %v928
    %1047 = vmatprep.subr.mxu0 0.0
    %1048 = vmatpush1.msra.mxu0 %v931
    %1049 = vmatprep.subr.mxu0 0.0
    %1050 = vmatpush1.msra.mxu0 %v934
    %1051 = vmatprep.subr.mxu0 0.0
    %1052 = vmatpush1.msra.mxu0 %v937
    %1053 = vmatprep.subr.mxu0 0.0
    %1054 = vmatpush1.msra.mxu0 %v940
    %1055 = vmatprep.subr.mxu0 0.0
    %1056 = vmatpush1.msra.mxu0 %v943
    %1057 = vmatprep.subr.mxu0 0.0
    %1058 = vmatpush1.msra.mxu0 %v946
    %1059 = vmatprep.subr.mxu0 0.0
    %1060 = vmatpush1.msra.mxu0 %v949
    %1061 = vmatprep.subr.mxu0 0.0
    %1062 = vmatpush1.msra.mxu0 %v952
    %1063 = vmatprep.subr.mxu0 0.0
    %1064 = vmatpush1.msra.mxu0 %v955
    %1065 = vmatprep.subr.mxu0 0.0
    %1066 = vmatpush1.msra.mxu0 %v958
    %1067 = vmatprep.subr.mxu0 0.0
    %1068 = vmatpush1.msra.mxu0 %v961
    %1069 = vmatprep.subr.mxu0 0.0
    %1070 = vmatpush1.msra.mxu0 %v964
    %1071 = vmatprep.subr.mxu0 0.0
    %1072 = vmatpush1.msra.mxu0 %v967
    %1073 = vmatprep.subr.mxu0 0.0
    %1074 = vmatpush1.msra.mxu0 %v970
    %1075 = vmatprep.subr.mxu0 0.0
    %1076 = vmatpush1.msra.mxu0 %v973
    %1077 = vmatprep.subr.mxu0 0.0
    %1078 = vmatpush1.msra.mxu0 0.0
    %1079 = vmatprep.subr.mxu0 0.0
    %1080 = vmatpush1.msra.mxu0 0.0
    %1081 = vmatprep.subr.mxu0 0.0
    %1082 = vmatpush1.msra.mxu0 0.0
    %1083 = vmatprep.subr.mxu0 0.0
    %1084 = vmatpush1.msra.mxu0 0.0
    %1085 = vmatprep.subr.mxu0 0.0
    %1086 = vmatpush1.msra.mxu0 0.0
    %1087 = vmatprep.subr.mxu0 0.0
    %1088 = vmatpush1.msra.mxu0 0.0
    %1089 = vmatprep.subr.mxu0 0.0
    %1090 = vmatpush1.msra.mxu0 0.0
    %1091 = vmatprep.subr.mxu0 0.0
    %1092 = vmatpush1.msra.mxu0 0.0
    %1093 = vmatprep.subr.mxu0 0.0
    %1094 = vmatpush1.msra.mxu0 0.0
    %1095 = vmatprep.subr.mxu0 0.0
    %1096 = vmatpush1.msra.mxu0 0.0
    %1097 = vmatprep.subr.mxu0 0.0
    %1098 = vmatpush1.msra.mxu0 0.0
    %1099 = vmatprep.subr.mxu0 0.0
    %1100 = vmatpush1.msra.mxu0 0.0
    %1101 = vmatprep.subr.mxu0 0.0
    %1102 = vmatpush1.msra.mxu0 0.0
    %1103 = vmatprep.subr.mxu0 0.0
    %1104 = vmatpush1.msra.mxu0 0.0
    %1105 = vmatprep.subr.mxu0 0.0
    %1106 = vmatpush1.msra.mxu0 0.0
    %1107 = vmatprep.subr.mxu0 0.0
    %1108 = vmatpush1.msra.mxu0 0.0
    %1109 = vmatprep.mubr.f32.mxu0 0.0
    %1110 = vmatmul.mubr.f32.gmra.mrb[0].mxu0 %v919
    %v1111 = vpop.f32.mrb[0].mxu0
    %v1112 = vadd.f32 0.0, %v1111
    %v1113 = vpop.f32.mrb[0].mxu0
    %1114 = vdwg.mxu0
    %v1115 = vadd.f32 %v923, %v1041
    %v1116 = vadd.f32 %v924, %v1043
    %v1117 = vxor.u32 %v1115, 2147483648
    %v1118 = vxor.u32 %v1116, 2147483648
    %v1119 = vmul.f32 %v1117, 1.442695
    %v1120 = vpow.pop %v1119
    %v1121 = vmul.f32 %v1118, 1.442695
    %v1122 = vpow.pop %v1121
    %v1123 = vadd.f32 %v1120, 1.0
    %v1124 = vadd.f32 %v1122, 1.0
    %v1125 = vrcp.pop %v1123
    %v1126 = vmul.f32 1.0, %v1125
    %v1127 = vrcp.pop %v1124
    %v1128 = vmul.f32 1.0, %v1127
    %v1129 = vadd.f32 %v1112, %v53
    %v1130 = vmul.f32 %v1126, %v1129
    %v1131 = vadd.f32 %v925, %v1130
    %v1132 = vtanh.pop %v1131
    %v1133 = vsub.f32 1.0, %v1128
    %v1134 = vmul.f32 %v1133, %v1132
    %v1135 = vmul.f32 %v1128, %v919
    %v1136 = vadd.f32 %v1134, %v1135
    %s1137 = scalar_lea.vmem [#allocation8], 32
    %1138 = vst [vmem:[%s1137] sm:$0xff] %v1136
    %s1139 = scalar_lea.vmem [#allocation3], 120
    %v1140 = vld [vmem:[%s1139] sm:$0xff]
    %v1141 = vld [vmem:[%s1139 + $0x8] sm:$0xff]
    %v1142 = vld [vmem:[%s1139 + $0x10] sm:$0xff]
    %v1143 = vld [vmem:[#allocation6] sm:$0xff]
    %v1144 = vld [vmem:[#allocation6 + $0x8] sm:$0xff]
    %v1145 = vld [vmem:[#allocation6 + $0x10] sm:$0xff]
    %v1146 = vld [vmem:[#allocation6 + $0x18] sm:$0xff]
    %v1147 = vld [vmem:[#allocation6 + $0x20] sm:$0xff]
    %v1148 = vld [vmem:[#allocation6 + $0x28] sm:$0xff]
    %v1149 = vld [vmem:[#allocation6 + $0x30] sm:$0xff]
    %v1150 = vld [vmem:[#allocation6 + $0x38] sm:$0xff]
    %v1151 = vld [vmem:[#allocation6 + $0x40] sm:$0xff]
    %v1152 = vld [vmem:[#allocation6 + $0x48] sm:$0xff]
    %v1153 = vld [vmem:[#allocation6 + $0x50] sm:$0xff]
    %v1154 = vld [vmem:[#allocation6 + $0x58] sm:$0xff]
    %v1155 = vld [vmem:[#allocation6 + $0x60] sm:$0xff]
    %v1156 = vld [vmem:[#allocation6 + $0x68] sm:$0xff]
    %v1157 = vld [vmem:[#allocation6 + $0x70] sm:$0xff]
    %v1158 = vld [vmem:[#allocation6 + $0x78] sm:$0xff]
    %v1159 = vld [vmem:[#allocation6 + $0x80] sm:$0xff]
    %v1160 = vld [vmem:[#allocation6 + $0x88] sm:$0xff]
    %v1161 = vld [vmem:[#allocation6 + $0x90] sm:$0xff]
    %v1162 = vld [vmem:[#allocation6 + $0x98] sm:$0xff]
    %v1163 = vld [vmem:[#allocation6 + $0xa0] sm:$0xff]
    %v1164 = vld [vmem:[#allocation6 + $0xa8] sm:$0xff]
    %v1165 = vld [vmem:[#allocation6 + $0xb0] sm:$0xff]
    %v1166 = vld [vmem:[#allocation6 + $0xb8] sm:$0xff]
    %v1167 = vld [vmem:[#allocation6 + $0xc0] sm:$0xff]
    %v1168 = vld [vmem:[#allocation6 + $0xc8] sm:$0xff]
    %v1169 = vld [vmem:[#allocation6 + $0xd0] sm:$0xff]
    %v1170 = vld [vmem:[#allocation6 + $0xd8] sm:$0xff]
    %v1171 = vld [vmem:[#allocation6 + $0xe0] sm:$0xff]
    %v1172 = vld [vmem:[#allocation6 + $0xe8] sm:$0xff]
    %v1173 = vld [vmem:[#allocation6 + $0xf0] sm:$0xff]
    %v1174 = vld [vmem:[#allocation6 + $0xf8] sm:$0xff]
    %v1175 = vld [vmem:[#allocation6 + $0x100] sm:$0xff]
    %v1176 = vld [vmem:[#allocation6 + $0x108] sm:$0xff]
    %v1177 = vld [vmem:[#allocation6 + $0x110] sm:$0xff]
    %v1178 = vld [vmem:[#allocation6 + $0x118] sm:$0xff]
    %v1179 = vld [vmem:[#allocation6 + $0x120] sm:$0xff]
    %v1180 = vld [vmem:[#allocation6 + $0x128] sm:$0xff]
    %v1181 = vld [vmem:[#allocation6 + $0x130] sm:$0xff]
    %v1182 = vld [vmem:[#allocation6 + $0x138] sm:$0xff]
    %v1183 = vld [vmem:[#allocation6 + $0x140] sm:$0xff]
    %v1184 = vld [vmem:[#allocation6 + $0x148] sm:$0xff]
    %v1185 = vld [vmem:[#allocation6 + $0x150] sm:$0xff]
    %v1186 = vld [vmem:[#allocation6 + $0x158] sm:$0xff]
    %v1187 = vld [vmem:[#allocation6 + $0x160] sm:$0xff]
    %v1188 = vld [vmem:[#allocation6 + $0x168] sm:$0xff]
    %v1189 = vld [vmem:[#allocation6 + $0x170] sm:$0xff]
    %v1190 = vld [vmem:[#allocation6 + $0x178] sm:$0xff]
    %1191 = vmatprep.subr.mxu0 %v1144
    %1192 = vmatpush1.msra.mxu0 %v1143
    %1193 = vmatprep.subr.mxu0 %v1147
    %1194 = vmatpush1.msra.mxu0 %v1146
    %1195 = vmatprep.subr.mxu0 %v1150
    %1196 = vmatpush1.msra.mxu0 %v1149
    %1197 = vmatprep.subr.mxu0 %v1153
    %1198 = vmatpush1.msra.mxu0 %v1152
    %1199 = vmatprep.subr.mxu0 %v1156
    %1200 = vmatpush1.msra.mxu0 %v1155
    %1201 = vmatprep.subr.mxu0 %v1159
    %1202 = vmatpush1.msra.mxu0 %v1158
    %1203 = vmatprep.subr.mxu0 %v1162
    %1204 = vmatpush1.msra.mxu0 %v1161
    %1205 = vmatprep.subr.mxu0 %v1165
    %1206 = vmatpush1.msra.mxu0 %v1164
    %1207 = vmatprep.subr.mxu0 %v1168
    %1208 = vmatpush1.msra.mxu0 %v1167
    %1209 = vmatprep.subr.mxu0 %v1171
    %1210 = vmatpush1.msra.mxu0 %v1170
    %1211 = vmatprep.subr.mxu0 %v1174
    %1212 = vmatpush1.msra.mxu0 %v1173
    %1213 = vmatprep.subr.mxu0 %v1177
    %1214 = vmatpush1.msra.mxu0 %v1176
    %1215 = vmatprep.subr.mxu0 %v1180
    %1216 = vmatpush1.msra.mxu0 %v1179
    %1217 = vmatprep.subr.mxu0 %v1183
    %1218 = vmatpush1.msra.mxu0 %v1182
    %1219 = vmatprep.subr.mxu0 %v1186
    %1220 = vmatpush1.msra.mxu0 %v1185
    %1221 = vmatprep.subr.mxu0 %v1189
    %1222 = vmatpush1.msra.mxu0 %v1188
    %1223 = vmatprep.subr.mxu0 0.0
    %1224 = vmatpush1.msra.mxu0 0.0
    %1225 = vmatprep.subr.mxu0 0.0
    %1226 = vmatpush1.msra.mxu0 0.0
    %1227 = vmatprep.subr.mxu0 0.0
    %1228 = vmatpush1.msra.mxu0 0.0
    %1229 = vmatprep.subr.mxu0 0.0
    %1230 = vmatpush1.msra.mxu0 0.0
    %1231 = vmatprep.subr.mxu0 0.0
    %1232 = vmatpush1.msra.mxu0 0.0
    %1233 = vmatprep.subr.mxu0 0.0
    %1234 = vmatpush1.msra.mxu0 0.0
    %1235 = vmatprep.subr.mxu0 0.0
    %1236 = vmatpush1.msra.mxu0 0.0
    %1237 = vmatprep.subr.mxu0 0.0
    %1238 = vmatpush1.msra.mxu0 0.0
    %1239 = vmatprep.subr.mxu0 0.0
    %1240 = vmatpush1.msra.mxu0 0.0
    %1241 = vmatprep.subr.mxu0 0.0
    %1242 = vmatpush1.msra.mxu0 0.0
    %1243 = vmatprep.subr.mxu0 0.0
    %1244 = vmatpush1.msra.mxu0 0.0
    %1245 = vmatprep.subr.mxu0 0.0
    %1246 = vmatpush1.msra.mxu0 0.0
    %1247 = vmatprep.subr.mxu0 0.0
    %1248 = vmatpush1.msra.mxu0 0.0
    %1249 = vmatprep.subr.mxu0 0.0
    %1250 = vmatpush1.msra.mxu0 0.0
    %1251 = vmatprep.subr.mxu0 0.0
    %1252 = vmatpush1.msra.mxu0 0.0
    %1253 = vmatprep.subr.mxu0 0.0
    %1254 = vmatpush1.msra.mxu0 0.0
    %1255 = vmatprep.mubr.f32.mxu0 0.0
    %1256 = vmatmul.mubr.f32.gmra.mrb[0].mxu0 %v1136
    %v1257 = vpop.f32.mrb[0].mxu0
    %v1258 = vadd.f32 0.0, %v1257
    %v1259 = vpop.f32.mrb[0].mxu0
    %v1260 = vadd.f32 0.0, %v1259
    %1261 = vdwg.mxu0
    %1262 = vmatprep.subr.mxu0 0.0
    %1263 = vmatpush1.msra.mxu0 %v1145
    %1264 = vmatprep.subr.mxu0 0.0
    %1265 = vmatpush1.msra.mxu0 %v1148
    %1266 = vmatprep.subr.mxu0 0.0
    %1267 = vmatpush1.msra.mxu0 %v1151
    %1268 = vmatprep.subr.mxu0 0.0
    %1269 = vmatpush1.msra.mxu0 %v1154
    %1270 = vmatprep.subr.mxu0 0.0
    %1271 = vmatpush1.msra.mxu0 %v1157
    %1272 = vmatprep.subr.mxu0 0.0
    %1273 = vmatpush1.msra.mxu0 %v1160
    %1274 = vmatprep.subr.mxu0 0.0
    %1275 = vmatpush1.msra.mxu0 %v1163
    %1276 = vmatprep.subr.mxu0 0.0
    %1277 = vmatpush1.msra.mxu0 %v1166
    %1278 = vmatprep.subr.mxu0 0.0
    %1279 = vmatpush1.msra.mxu0 %v1169
    %1280 = vmatprep.subr.mxu0 0.0
    %1281 = vmatpush1.msra.mxu0 %v1172
    %1282 = vmatprep.subr.mxu0 0.0
    %1283 = vmatpush1.msra.mxu0 %v1175
    %1284 = vmatprep.subr.mxu0 0.0
    %1285 = vmatpush1.msra.mxu0 %v1178
    %1286 = vmatprep.subr.mxu0 0.0
    %1287 = vmatpush1.msra.mxu0 %v1181
    %1288 = vmatprep.subr.mxu0 0.0
    %1289 = vmatpush1.msra.mxu0 %v1184
    %1290 = vmatprep.subr.mxu0 0.0
    %1291 = vmatpush1.msra.mxu0 %v1187
    %1292 = vmatprep.subr.mxu0 0.0
    %1293 = vmatpush1.msra.mxu0 %v1190
    %1294 = vmatprep.subr.mxu0 0.0
    %1295 = vmatpush1.msra.mxu0 0.0
    %1296 = vmatprep.subr.mxu0 0.0
    %1297 = vmatpush1.msra.mxu0 0.0
    %1298 = vmatprep.subr.mxu0 0.0
    %1299 = vmatpush1.msra.mxu0 0.0
    %1300 = vmatprep.subr.mxu0 0.0
    %1301 = vmatpush1.msra.mxu0 0.0
    %1302 = vmatprep.subr.mxu0 0.0
    %1303 = vmatpush1.msra.mxu0 0.0
    %1304 = vmatprep.subr.mxu0 0.0
    %1305 = vmatpush1.msra.mxu0 0.0
    %1306 = vmatprep.subr.mxu0 0.0
    %1307 = vmatpush1.msra.mxu0 0.0
    %1308 = vmatprep.subr.mxu0 0.0
    %1309 = vmatpush1.msra.mxu0 0.0
    %1310 = vmatprep.subr.mxu0 0.0
    %1311 = vmatpush1.msra.mxu0 0.0
    %1312 = vmatprep.subr.mxu0 0.0
    %1313 = vmatpush1.msra.mxu0 0.0
    %1314 = vmatprep.subr.mxu0 0.0
    %1315 = vmatpush1.msra.mxu0 0.0
    %1316 = vmatprep.subr.mxu0 0.0
    %1317 = vmatpush1.msra.mxu0 0.0
    %1318 = vmatprep.subr.mxu0 0.0
    %1319 = vmatpush1.msra.mxu0 0.0
    %1320 = vmatprep.subr.mxu0 0.0
    %1321 = vmatpush1.msra.mxu0 0.0
    %1322 = vmatprep.subr.mxu0 0.0
    %1323 = vmatpush1.msra.mxu0 0.0
    %1324 = vmatprep.subr.mxu0 0.0
    %1325 = vmatpush1.msra.mxu0 0.0
    %1326 = vmatprep.mubr.f32.mxu0 0.0
    %1327 = vmatmul.mubr.f32.gmra.mrb[0].mxu0 %v1136
    %v1328 = vpop.f32.mrb[0].mxu0
    %v1329 = vadd.f32 0.0, %v1328
    %v1330 = vpop.f32.mrb[0].mxu0
    %1331 = vdwg.mxu0
    %v1332 = vadd.f32 %v1140, %v1258
    %v1333 = vadd.f32 %v1141, %v1260
    %v1334 = vxor.u32 %v1332, 2147483648
    %v1335 = vxor.u32 %v1333, 2147483648
    %v1336 = vmul.f32 %v1334, 1.442695
    %v1337 = vpow.pop %v1336
    %v1338 = vmul.f32 %v1335, 1.442695
    %v1339 = vpow.pop %v1338
    %v1340 = vadd.f32 %v1337, 1.0
    %v1341 = vadd.f32 %v1339, 1.0
    %v1342 = vrcp.pop %v1340
    %v1343 = vmul.f32 1.0, %v1342
    %v1344 = vrcp.pop %v1341
    %v1345 = vmul.f32 1.0, %v1344
    %v1346 = vadd.f32 %v1329, %v53
    %v1347 = vmul.f32 %v1343, %v1346
    %v1348 = vadd.f32 %v1142, %v1347
    %v1349 = vtanh.pop %v1348
    %v1350 = vsub.f32 1.0, %v1345
    %v1351 = vmul.f32 %v1350, %v1349
    %v1352 = vmul.f32 %v1345, %v1136
    %v1353 = vadd.f32 %v1351, %v1352
    %s1354 = scalar_lea.vmem [#allocation8], 40
    %1355 = vst [vmem:[%s1354] sm:$0xff] %v1353
    %s1356 = scalar_lea.vmem [#allocation3], 144
    %v1357 = vld [vmem:[%s1356] sm:$0xff]
    %v1358 = vld [vmem:[%s1356 + $0x8] sm:$0xff]
    %v1359 = vld [vmem:[%s1356 + $0x10] sm:$0xff]
    %v1360 = vld [vmem:[#allocation6] sm:$0xff]
    %v1361 = vld [vmem:[#allocation6 + $0x8] sm:$0xff]
    %v1362 = vld [vmem:[#allocation6 + $0x10] sm:$0xff]
    %v1363 = vld [vmem:[#allocation6 + $0x18] sm:$0xff]
    %v1364 = vld [vmem:[#allocation6 + $0x20] sm:$0xff]
    %v1365 = vld [vmem:[#allocation6 + $0x28] sm:$0xff]
    %v1366 = vld [vmem:[#allocation6 + $0x30] sm:$0xff]
    %v1367 = vld [vmem:[#allocation6 + $0x38] sm:$0xff]
    %v1368 = vld [vmem:[#allocation6 + $0x40] sm:$0xff]
    %v1369 = vld [vmem:[#allocation6 + $0x48] sm:$0xff]
    %v1370 = vld [vmem:[#allocation6 + $0x50] sm:$0xff]
    %v1371 = vld [vmem:[#allocation6 + $0x58] sm:$0xff]
    %v1372 = vld [vmem:[#allocation6 + $0x60] sm:$0xff]
    %v1373 = vld [vmem:[#allocation6 + $0x68] sm:$0xff]
    %v1374 = vld [vmem:[#allocation6 + $0x70] sm:$0xff]
    %v1375 = vld [vmem:[#allocation6 + $0x78] sm:$0xff]
    %v1376 = vld [vmem:[#allocation6 + $0x80] sm:$0xff]
    %v1377 = vld [vmem:[#allocation6 + $0x88] sm:$0xff]
    %v1378 = vld [vmem:[#allocation6 + $0x90] sm:$0xff]
    %v1379 = vld [vmem:[#allocation6 + $0x98] sm:$0xff]
    %v1380 = vld [vmem:[#allocation6 + $0xa0] sm:$0xff]
    %v1381 = vld [vmem:[#allocation6 + $0xa8] sm:$0xff]
    %v1382 = vld [vmem:[#allocation6 + $0xb0] sm:$0xff]
    %v1383 = vld [vmem:[#allocation6 + $0xb8] sm:$0xff]
    %v1384 = vld [vmem:[#allocation6 + $0xc0] sm:$0xff]
    %v1385 = vld [vmem:[#allocation6 + $0xc8] sm:$0xff]
    %v1386 = vld [vmem:[#allocation6 + $0xd0] sm:$0xff]
    %v1387 = vld [vmem:[#allocation6 + $0xd8] sm:$0xff]
    %v1388 = vld [vmem:[#allocation6 + $0xe0] sm:$0xff]
    %v1389 = vld [vmem:[#allocation6 + $0xe8] sm:$0xff]
    %v1390 = vld [vmem:[#allocation6 + $0xf0] sm:$0xff]
    %v1391 = vld [vmem:[#allocation6 + $0xf8] sm:$0xff]
    %v1392 = vld [vmem:[#allocation6 + $0x100] sm:$0xff]
    %v1393 = vld [vmem:[#allocation6 + $0x108] sm:$0xff]
    %v1394 = vld [vmem:[#allocation6 + $0x110] sm:$0xff]
    %v1395 = vld [vmem:[#allocation6 + $0x118] sm:$0xff]
    %v1396 = vld [vmem:[#allocation6 + $0x120] sm:$0xff]
    %v1397 = vld [vmem:[#allocation6 + $0x128] sm:$0xff]
    %v1398 = vld [vmem:[#allocation6 + $0x130] sm:$0xff]
    %v1399 = vld [vmem:[#allocation6 + $0x138] sm:$0xff]
    %v1400 = vld [vmem:[#allocation6 + $0x140] sm:$0xff]
    %v1401 = vld [vmem:[#allocation6 + $0x148] sm:$0xff]
    %v1402 = vld [vmem:[#allocation6 + $0x150] sm:$0xff]
    %v1403 = vld [vmem:[#allocation6 + $0x158] sm:$0xff]
    %v1404 = vld [vmem:[#allocation6 + $0x160] sm:$0xff]
    %v1405 = vld [vmem:[#allocation6 + $0x168] sm:$0xff]
    %v1406 = vld [vmem:[#allocation6 + $0x170] sm:$0xff]
    %v1407 = vld [vmem:[#allocation6 + $0x178] sm:$0xff]
    %1408 = vmatprep.subr.mxu0 %v1361
    %1409 = vmatpush1.msra.mxu0 %v1360
    %1410 = vmatprep.subr.mxu0 %v1364
    %1411 = vmatpush1.msra.mxu0 %v1363
    %1412 = vmatprep.subr.mxu0 %v1367
    %1413 = vmatpush1.msra.mxu0 %v1366
    %1414 = vmatprep.subr.mxu0 %v1370
    %1415 = vmatpush1.msra.mxu0 %v1369
    %1416 = vmatprep.subr.mxu0 %v1373
    %1417 = vmatpush1.msra.mxu0 %v1372
    %1418 = vmatprep.subr.mxu0 %v1376
    %1419 = vmatpush1.msra.mxu0 %v1375
    %1420 = vmatprep.subr.mxu0 %v1379
    %1421 = vmatpush1.msra.mxu0 %v1378
    %1422 = vmatprep.subr.mxu0 %v1382
    %1423 = vmatpush1.msra.mxu0 %v1381
    %1424 = vmatprep.subr.mxu0 %v1385
    %1425 = vmatpush1.msra.mxu0 %v1384
    %1426 = vmatprep.subr.mxu0 %v1388
    %1427 = vmatpush1.msra.mxu0 %v1387
    %1428 = vmatprep.subr.mxu0 %v1391
    %1429 = vmatpush1.msra.mxu0 %v1390
    %1430 = vmatprep.subr.mxu0 %v1394
    %1431 = vmatpush1.msra.mxu0 %v1393
    %1432 = vmatprep.subr.mxu0 %v1397
    %1433 = vmatpush1.msra.mxu0 %v1396
    %1434 = vmatprep.subr.mxu0 %v1400
    %1435 = vmatpush1.msra.mxu0 %v1399
    %1436 = vmatprep.subr.mxu0 %v1403
    %1437 = vmatpush1.msra.mxu0 %v1402
    %1438 = vmatprep.subr.mxu0 %v1406
    %1439 = vmatpush1.msra.mxu0 %v1405
    %1440 = vmatprep.subr.mxu0 0.0
    %1441 = vmatpush1.msra.mxu0 0.0
    %1442 = vmatprep.subr.mxu0 0.0
    %1443 = vmatpush1.msra.mxu0 0.0
    %1444 = vmatprep.subr.mxu0 0.0
    %1445 = vmatpush1.msra.mxu0 0.0
    %1446 = vmatprep.subr.mxu0 0.0
    %1447 = vmatpush1.msra.mxu0 0.0
    %1448 = vmatprep.subr.mxu0 0.0
    %1449 = vmatpush1.msra.mxu0 0.0
    %1450 = vmatprep.subr.mxu0 0.0
    %1451 = vmatpush1.msra.mxu0 0.0
    %1452 = vmatprep.subr.mxu0 0.0
    %1453 = vmatpush1.msra.mxu0 0.0
    %1454 = vmatprep.subr.mxu0 0.0
    %1455 = vmatpush1.msra.mxu0 0.0
    %1456 = vmatprep.subr.mxu0 0.0
    %1457 = vmatpush1.msra.mxu0 0.0
    %1458 = vmatprep.subr.mxu0 0.0
    %1459 = vmatpush1.msra.mxu0 0.0
    %1460 = vmatprep.subr.mxu0 0.0
    %1461 = vmatpush1.msra.mxu0 0.0
    %1462 = vmatprep.subr.mxu0 0.0
    %1463 = vmatpush1.msra.mxu0 0.0
    %1464 = vmatprep.subr.mxu0 0.0
    %1465 = vmatpush1.msra.mxu0 0.0
    %1466 = vmatprep.subr.mxu0 0.0
    %1467 = vmatpush1.msra.mxu0 0.0
    %1468 = vmatprep.subr.mxu0 0.0
    %1469 = vmatpush1.msra.mxu0 0.0
    %1470 = vmatprep.subr.mxu0 0.0
    %1471 = vmatpush1.msra.mxu0 0.0
    %1472 = vmatprep.mubr.f32.mxu0 0.0
    %1473 = vmatmul.mubr.f32.gmra.mrb[0].mxu0 %v1353
    %v1474 = vpop.f32.mrb[0].mxu0
    %v1475 = vadd.f32 0.0, %v1474
    %v1476 = vpop.f32.mrb[0].mxu0
    %v1477 = vadd.f32 0.0, %v1476
    %1478 = vdwg.mxu0
    %1479 = vmatprep.subr.mxu0 0.0
    %1480 = vmatpush1.msra.mxu0 %v1362
    %1481 = vmatprep.subr.mxu0 0.0
    %1482 = vmatpush1.msra.mxu0 %v1365
    %1483 = vmatprep.subr.mxu0 0.0
    %1484 = vmatpush1.msra.mxu0 %v1368
    %1485 = vmatprep.subr.mxu0 0.0
    %1486 = vmatpush1.msra.mxu0 %v1371
    %1487 = vmatprep.subr.mxu0 0.0
    %1488 = vmatpush1.msra.mxu0 %v1374
    %1489 = vmatprep.subr.mxu0 0.0
    %1490 = vmatpush1.msra.mxu0 %v1377
    %1491 = vmatprep.subr.mxu0 0.0
    %1492 = vmatpush1.msra.mxu0 %v1380
    %1493 = vmatprep.subr.mxu0 0.0
    %1494 = vmatpush1.msra.mxu0 %v1383
    %1495 = vmatprep.subr.mxu0 0.0
    %1496 = vmatpush1.msra.mxu0 %v1386
    %1497 = vmatprep.subr.mxu0 0.0
    %1498 = vmatpush1.msra.mxu0 %v1389
    %1499 = vmatprep.subr.mxu0 0.0
    %1500 = vmatpush1.msra.mxu0 %v1392
    %1501 = vmatprep.subr.mxu0 0.0
    %1502 = vmatpush1.msra.mxu0 %v1395
    %1503 = vmatprep.subr.mxu0 0.0
    %1504 = vmatpush1.msra.mxu0 %v1398
    %1505 = vmatprep.subr.mxu0 0.0
    %1506 = vmatpush1.msra.mxu0 %v1401
    %1507 = vmatprep.subr.mxu0 0.0
    %1508 = vmatpush1.msra.mxu0 %v1404
    %1509 = vmatprep.subr.mxu0 0.0
    %1510 = vmatpush1.msra.mxu0 %v1407
    %1511 = vmatprep.subr.mxu0 0.0
    %1512 = vmatpush1.msra.mxu0 0.0
    %1513 = vmatprep.subr.mxu0 0.0
    %1514 = vmatpush1.msra.mxu0 0.0
    %1515 = vmatprep.subr.mxu0 0.0
    %1516 = vmatpush1.msra.mxu0 0.0
    %1517 = vmatprep.subr.mxu0 0.0
    %1518 = vmatpush1.msra.mxu0 0.0
    %1519 = vmatprep.subr.mxu0 0.0
    %1520 = vmatpush1.msra.mxu0 0.0
    %1521 = vmatprep.subr.mxu0 0.0
    %1522 = vmatpush1.msra.mxu0 0.0
    %1523 = vmatprep.subr.mxu0 0.0
    %1524 = vmatpush1.msra.mxu0 0.0
    %1525 = vmatprep.subr.mxu0 0.0
    %1526 = vmatpush1.msra.mxu0 0.0
    %1527 = vmatprep.subr.mxu0 0.0
    %1528 = vmatpush1.msra.mxu0 0.0
    %1529 = vmatprep.subr.mxu0 0.0
    %1530 = vmatpush1.msra.mxu0 0.0
    %1531 = vmatprep.subr.mxu0 0.0
    %1532 = vmatpush1.msra.mxu0 0.0
    %1533 = vmatprep.subr.mxu0 0.0
    %1534 = vmatpush1.msra.mxu0 0.0
    %1535 = vmatprep.subr.mxu0 0.0
    %1536 = vmatpush1.msra.mxu0 0.0
    %1537 = vmatprep.subr.mxu0 0.0
    %1538 = vmatpush1.msra.mxu0 0.0
    %1539 = vmatprep.subr.mxu0 0.0
    %1540 = vmatpush1.msra.mxu0 0.0
    %1541 = vmatprep.subr.mxu0 0.0
    %1542 = vmatpush1.msra.mxu0 0.0
    %1543 = vmatprep.mubr.f32.mxu0 0.0
    %1544 = vmatmul.mubr.f32.gmra.mrb[0].mxu0 %v1353
    %v1545 = vpop.f32.mrb[0].mxu0
    %v1546 = vadd.f32 0.0, %v1545
    %v1547 = vpop.f32.mrb[0].mxu0
    %1548 = vdwg.mxu0
    %v1549 = vadd.f32 %v1357, %v1475
    %v1550 = vadd.f32 %v1358, %v1477
    %v1551 = vxor.u32 %v1549, 2147483648
    %v1552 = vxor.u32 %v1550, 2147483648
    %v1553 = vmul.f32 %v1551, 1.442695
    %v1554 = vpow.pop %v1553
    %v1555 = vmul.f32 %v1552, 1.442695
    %v1556 = vpow.pop %v1555
    %v1557 = vadd.f32 %v1554, 1.0
    %v1558 = vadd.f32 %v1556, 1.0
    %v1559 = vrcp.pop %v1557
    %v1560 = vmul.f32 1.0, %v1559
    %v1561 = vrcp.pop %v1558
    %v1562 = vmul.f32 1.0, %v1561
    %v1563 = vadd.f32 %v1546, %v53
    %v1564 = vmul.f32 %v1560, %v1563
    %v1565 = vadd.f32 %v1359, %v1564
    %v1566 = vtanh.pop %v1565
    %v1567 = vsub.f32 1.0, %v1562
    %v1568 = vmul.f32 %v1567, %v1566
    %v1569 = vmul.f32 %v1562, %v1353
    %v1570 = vadd.f32 %v1568, %v1569
    %s1571 = scalar_lea.vmem [#allocation8], 48
    %1572 = vst [vmem:[%s1571] sm:$0xff] %v1570
    %s1573 = scalar_lea.vmem [#allocation3], 168
    %v1574 = vld [vmem:[%s1573] sm:$0xff]
    %v1575 = vld [vmem:[%s1573 + $0x8] sm:$0xff]
    %v1576 = vld [vmem:[%s1573 + $0x10] sm:$0xff]
    %v1577 = vld [vmem:[#allocation6] sm:$0xff]
    %v1578 = vld [vmem:[#allocation6 + $0x8] sm:$0xff]
    %v1579 = vld [vmem:[#allocation6 + $0x10] sm:$0xff]
    %v1580 = vld [vmem:[#allocation6 + $0x18] sm:$0xff]
    %v1581 = vld [vmem:[#allocation6 + $0x20] sm:$0xff]
    %v1582 = vld [vmem:[#allocation6 + $0x28] sm:$0xff]
    %v1583 = vld [vmem:[#allocation6 + $0x30] sm:$0xff]
    %v1584 = vld [vmem:[#allocation6 + $0x38] sm:$0xff]
    %v1585 = vld [vmem:[#allocation6 + $0x40] sm:$0xff]
    %v1586 = vld [vmem:[#allocation6 + $0x48] sm:$0xff]
    %v1587 = vld [vmem:[#allocation6 + $0x50] sm:$0xff]
    %v1588 = vld [vmem:[#allocation6 + $0x58] sm:$0xff]
    %v1589 = vld [vmem:[#allocation6 + $0x60] sm:$0xff]
    %v1590 = vld [vmem:[#allocation6 + $0x68] sm:$0xff]
    %v1591 = vld [vmem:[#allocation6 + $0x70] sm:$0xff]
    %v1592 = vld [vmem:[#allocation6 + $0x78] sm:$0xff]
    %v1593 = vld [vmem:[#allocation6 + $0x80] sm:$0xff]
    %v1594 = vld [vmem:[#allocation6 + $0x88] sm:$0xff]
    %v1595 = vld [vmem:[#allocation6 + $0x90] sm:$0xff]
    %v1596 = vld [vmem:[#allocation6 + $0x98] sm:$0xff]
    %v1597 = vld [vmem:[#allocation6 + $0xa0] sm:$0xff]
    %v1598 = vld [vmem:[#allocation6 + $0xa8] sm:$0xff]
    %v1599 = vld [vmem:[#allocation6 + $0xb0] sm:$0xff]
    %v1600 = vld [vmem:[#allocation6 + $0xb8] sm:$0xff]
    %v1601 = vld [vmem:[#allocation6 + $0xc0] sm:$0xff]
    %v1602 = vld [vmem:[#allocation6 + $0xc8] sm:$0xff]
    %v1603 = vld [vmem:[#allocation6 + $0xd0] sm:$0xff]
    %v1604 = vld [vmem:[#allocation6 + $0xd8] sm:$0xff]
    %v1605 = vld [vmem:[#allocation6 + $0xe0] sm:$0xff]
    %v1606 = vld [vmem:[#allocation6 + $0xe8] sm:$0xff]
    %v1607 = vld [vmem:[#allocation6 + $0xf0] sm:$0xff]
    %v1608 = vld [vmem:[#allocation6 + $0xf8] sm:$0xff]
    %v1609 = vld [vmem:[#allocation6 + $0x100] sm:$0xff]
    %v1610 = vld [vmem:[#allocation6 + $0x108] sm:$0xff]
    %v1611 = vld [vmem:[#allocation6 + $0x110] sm:$0xff]
    %v1612 = vld [vmem:[#allocation6 + $0x118] sm:$0xff]
    %v1613 = vld [vmem:[#allocation6 + $0x120] sm:$0xff]
    %v1614 = vld [vmem:[#allocation6 + $0x128] sm:$0xff]
    %v1615 = vld [vmem:[#allocation6 + $0x130] sm:$0xff]
    %v1616 = vld [vmem:[#allocation6 + $0x138] sm:$0xff]
    %v1617 = vld [vmem:[#allocation6 + $0x140] sm:$0xff]
    %v1618 = vld [vmem:[#allocation6 + $0x148] sm:$0xff]
    %v1619 = vld [vmem:[#allocation6 + $0x150] sm:$0xff]
    %v1620 = vld [vmem:[#allocation6 + $0x158] sm:$0xff]
    %v1621 = vld [vmem:[#allocation6 + $0x160] sm:$0xff]
    %v1622 = vld [vmem:[#allocation6 + $0x168] sm:$0xff]
    %v1623 = vld [vmem:[#allocation6 + $0x170] sm:$0xff]
    %v1624 = vld [vmem:[#allocation6 + $0x178] sm:$0xff]
    %1625 = vmatprep.subr.mxu0 %v1578
    %1626 = vmatpush1.msra.mxu0 %v1577
    %1627 = vmatprep.subr.mxu0 %v1581
    %1628 = vmatpush1.msra.mxu0 %v1580
    %1629 = vmatprep.subr.mxu0 %v1584
    %1630 = vmatpush1.msra.mxu0 %v1583
    %1631 = vmatprep.subr.mxu0 %v1587
    %1632 = vmatpush1.msra.mxu0 %v1586
    %1633 = vmatprep.subr.mxu0 %v1590
    %1634 = vmatpush1.msra.mxu0 %v1589
    %1635 = vmatprep.subr.mxu0 %v1593
    %1636 = vmatpush1.msra.mxu0 %v1592
    %1637 = vmatprep.subr.mxu0 %v1596
    %1638 = vmatpush1.msra.mxu0 %v1595
    %1639 = vmatprep.subr.mxu0 %v1599
    %1640 = vmatpush1.msra.mxu0 %v1598
    %1641 = vmatprep.subr.mxu0 %v1602
    %1642 = vmatpush1.msra.mxu0 %v1601
    %1643 = vmatprep.subr.mxu0 %v1605
    %1644 = vmatpush1.msra.mxu0 %v1604
    %1645 = vmatprep.subr.mxu0 %v1608
    %1646 = vmatpush1.msra.mxu0 %v1607
    %1647 = vmatprep.subr.mxu0 %v1611
    %1648 = vmatpush1.msra.mxu0 %v1610
    %1649 = vmatprep.subr.mxu0 %v1614
    %1650 = vmatpush1.msra.mxu0 %v1613
    %1651 = vmatprep.subr.mxu0 %v1617
    %1652 = vmatpush1.msra.mxu0 %v1616
    %1653 = vmatprep.subr.mxu0 %v1620
    %1654 = vmatpush1.msra.mxu0 %v1619
    %1655 = vmatprep.subr.mxu0 %v1623
    %1656 = vmatpush1.msra.mxu0 %v1622
    %1657 = vmatprep.subr.mxu0 0.0
    %1658 = vmatpush1.msra.mxu0 0.0
    %1659 = vmatprep.subr.mxu0 0.0
    %1660 = vmatpush1.msra.mxu0 0.0
    %1661 = vmatprep.subr.mxu0 0.0
    %1662 = vmatpush1.msra.mxu0 0.0
    %1663 = vmatprep.subr.mxu0 0.0
    %1664 = vmatpush1.msra.mxu0 0.0
    %1665 = vmatprep.subr.mxu0 0.0
    %1666 = vmatpush1.msra.mxu0 0.0
    %1667 = vmatprep.subr.mxu0 0.0
    %1668 = vmatpush1.msra.mxu0 0.0
    %1669 = vmatprep.subr.mxu0 0.0
    %1670 = vmatpush1.msra.mxu0 0.0
    %1671 = vmatprep.subr.mxu0 0.0
    %1672 = vmatpush1.msra.mxu0 0.0
    %1673 = vmatprep.subr.mxu0 0.0
    %1674 = vmatpush1.msra.mxu0 0.0
    %1675 = vmatprep.subr.mxu0 0.0
    %1676 = vmatpush1.msra.mxu0 0.0
    %1677 = vmatprep.subr.mxu0 0.0
    %1678 = vmatpush1.msra.mxu0 0.0
    %1679 = vmatprep.subr.mxu0 0.0
    %1680 = vmatpush1.msra.mxu0 0.0
    %1681 = vmatprep.subr.mxu0 0.0
    %1682 = vmatpush1.msra.mxu0 0.0
    %1683 = vmatprep.subr.mxu0 0.0
    %1684 = vmatpush1.msra.mxu0 0.0
    %1685 = vmatprep.subr.mxu0 0.0
    %1686 = vmatpush1.msra.mxu0 0.0
    %1687 = vmatprep.subr.mxu0 0.0
    %1688 = vmatpush1.msra.mxu0 0.0
    %1689 = vmatprep.mubr.f32.mxu0 0.0
    %1690 = vmatmul.mubr.f32.gmra.mrb[0].mxu0 %v1570
    %v1691 = vpop.f32.mrb[0].mxu0
    %v1692 = vadd.f32 0.0, %v1691
    %v1693 = vpop.f32.mrb[0].mxu0
    %v1694 = vadd.f32 0.0, %v1693
    %1695 = vdwg.mxu0
    %1696 = vmatprep.subr.mxu0 0.0
    %1697 = vmatpush1.msra.mxu0 %v1579
    %1698 = vmatprep.subr.mxu0 0.0
    %1699 = vmatpush1.msra.mxu0 %v1582
    %1700 = vmatprep.subr.mxu0 0.0
    %1701 = vmatpush1.msra.mxu0 %v1585
    %1702 = vmatprep.subr.mxu0 0.0
    %1703 = vmatpush1.msra.mxu0 %v1588
    %1704 = vmatprep.subr.mxu0 0.0
    %1705 = vmatpush1.msra.mxu0 %v1591
    %1706 = vmatprep.subr.mxu0 0.0
    %1707 = vmatpush1.msra.mxu0 %v1594
    %1708 = vmatprep.subr.mxu0 0.0
    %1709 = vmatpush1.msra.mxu0 %v1597
    %1710 = vmatprep.subr.mxu0 0.0
    %1711 = vmatpush1.msra.mxu0 %v1600
    %1712 = vmatprep.subr.mxu0 0.0
    %1713 = vmatpush1.msra.mxu0 %v1603
    %1714 = vmatprep.subr.mxu0 0.0
    %1715 = vmatpush1.msra.mxu0 %v1606
    %1716 = vmatprep.subr.mxu0 0.0
    %1717 = vmatpush1.msra.mxu0 %v1609
    %1718 = vmatprep.subr.mxu0 0.0
    %1719 = vmatpush1.msra.mxu0 %v1612
    %1720 = vmatprep.subr.mxu0 0.0
    %1721 = vmatpush1.msra.mxu0 %v1615
    %1722 = vmatprep.subr.mxu0 0.0
    %1723 = vmatpush1.msra.mxu0 %v1618
    %1724 = vmatprep.subr.mxu0 0.0
    %1725 = vmatpush1.msra.mxu0 %v1621
    %1726 = vmatprep.subr.mxu0 0.0
    %1727 = vmatpush1.msra.mxu0 %v1624
    %1728 = vmatprep.subr.mxu0 0.0
    %1729 = vmatpush1.msra.mxu0 0.0
    %1730 = vmatprep.subr.mxu0 0.0
    %1731 = vmatpush1.msra.mxu0 0.0
    %1732 = vmatprep.subr.mxu0 0.0
    %1733 = vmatpush1.msra.mxu0 0.0
    %1734 = vmatprep.subr.mxu0 0.0
    %1735 = vmatpush1.msra.mxu0 0.0
    %1736 = vmatprep.subr.mxu0 0.0
    %1737 = vmatpush1.msra.mxu0 0.0
    %1738 = vmatprep.subr.mxu0 0.0
    %1739 = vmatpush1.msra.mxu0 0.0
    %1740 = vmatprep.subr.mxu0 0.0
    %1741 = vmatpush1.msra.mxu0 0.0
    %1742 = vmatprep.subr.mxu0 0.0
    %1743 = vmatpush1.msra.mxu0 0.0
    %1744 = vmatprep.subr.mxu0 0.0
    %1745 = vmatpush1.msra.mxu0 0.0
    %1746 = vmatprep.subr.mxu0 0.0
    %1747 = vmatpush1.msra.mxu0 0.0
    %1748 = vmatprep.subr.mxu0 0.0
    %1749 = vmatpush1.msra.mxu0 0.0
    %1750 = vmatprep.subr.mxu0 0.0
    %1751 = vmatpush1.msra.mxu0 0.0
    %1752 = vmatprep.subr.mxu0 0.0
    %1753 = vmatpush1.msra.mxu0 0.0
    %1754 = vmatprep.subr.mxu0 0.0
    %1755 = vmatpush1.msra.mxu0 0.0
    %1756 = vmatprep.subr.mxu0 0.0
    %1757 = vmatpush1.msra.mxu0 0.0
    %1758 = vmatprep.subr.mxu0 0.0
    %1759 = vmatpush1.msra.mxu0 0.0
    %1760 = vmatprep.mubr.f32.mxu0 0.0
    %1761 = vmatmul.mubr.f32.gmra.mrb[0].mxu0 %v1570
    %v1762 = vpop.f32.mrb[0].mxu0
    %v1763 = vadd.f32 0.0, %v1762
    %v1764 = vpop.f32.mrb[0].mxu0
    %1765 = vdwg.mxu0
    %v1766 = vadd.f32 %v1574, %v1692
    %v1767 = vadd.f32 %v1575, %v1694
    %v1768 = vxor.u32 %v1766, 2147483648
    %v1769 = vxor.u32 %v1767, 2147483648
    %v1770 = vmul.f32 %v1768, 1.442695
    %v1771 = vpow.pop %v1770
    %v1772 = vmul.f32 %v1769, 1.442695
    %v1773 = vpow.pop %v1772
    %v1774 = vadd.f32 %v1771, 1.0
    %v1775 = vadd.f32 %v1773, 1.0
    %v1776 = vrcp.pop %v1774
    %v1777 = vmul.f32 1.0, %v1776
    %v1778 = vrcp.pop %v1775
    %v1779 = vmul.f32 1.0, %v1778
    %v1780 = vadd.f32 %v1763, %v53
    %v1781 = vmul.f32 %v1777, %v1780
    %v1782 = vadd.f32 %v1576, %v1781
    %v1783 = vtanh.pop %v1782
    %v1784 = vsub.f32 1.0, %v1779
    %v1785 = vmul.f32 %v1784, %v1783
    %v1786 = vmul.f32 %v1779, %v1570
    %v1787 = vadd.f32 %v1785, %v1786
    %s1788 = scalar_lea.vmem [#allocation8], 56
    %1789 = vst [vmem:[%s1788] sm:$0xff] %v1787
    %1790 = vst [vmem:[#allocation2] sm:$0xff] %v1787
    // Predicated region
    $region26: #{tpu_custom_call.1} parent=1 // pred_check
      _
    $region27: #{tpu_custom_call.1} parent=1 // pred_check_branch
      %1792 = sbr.rel (0) target = $region29
    $region28: #{tpu_custom_call.1} parent=1 // pred_region
      %s1794 = ssub.s32 1024, 1024
      %1795 = vsyncadd [#allocation5], %s1794
      %s1796 = sshll.u32 [#allocation8], 4
      %s1797 = int_to_ptr.vmem [resolvable:$true] %s1796
      %1802 = dma.vmem_to_hbm [thread:$0]  %s1797, 1024, %s3, [#allocation5], 128, 128, 8
    $region29: #{tpu_custom_call.1} parent=1 // pred_fallthru
      _
    // Predicated region
    $region30: #{tpu_custom_call.1} parent=1 // pred_check
      _
    $region31: #{tpu_custom_call.1} parent=1 // pred_check_branch
      %1804 = sbr.rel (0) target = $region33
    $region32: #{tpu_custom_call.1} parent=1 // pred_region
      %1805 = dma.done [#allocation5], 1024
    $region33: #{tpu_custom_call.1} parent=1 // pred_fallthru
      _
    %1806 = vsyncpa [#allocation4], 1
    %1807 = vsyncpa [#allocation7], 1
    %1808 = vsyncpa [#allocation5], 1

</llo_original>
